<compile_context>
chip_gen: v7x
topology: tpu7x:2x2x1
jax: 0.10.0
libtpu: 0.0.40
codegen_flags: <defaults>
</compile_context>

<pallas_src>
import functools

import jax
import jax.numpy as jnp
from jax.experimental import pallas as pl
from jax.experimental.pallas import tpu as pltpu


def _multibox_kernel(gt_ref, boxes_ref, locs_ref, scores_ref, priors_ref,
                     stats_ref, neg_ref, *, threshold, neg_pos_ratio):
    # gt_ref    : (1, 16, K)   rows 0-7 = bf16-exact hi [xmin,ymin,xmax,ymax,label,0,0,0]
    #                          rows 8-15 = f32 residual lo of the same rows
    # boxes_ref : (1, n_obj, 4)  locs_ref: (1, 4, N)   scores_ref: (1, C, N)
    # priors_ref: (8, N)  rows 0-3 xy corners, rows 4-7 cxcy
    # stats_ref : (1, 1, 128)  lanes 0..3 = [n_pos, conf_pos_sum, hard_neg_sum, loc_abs_sum]
    # neg_ref   : (R, 128) VMEM scratch, R = ceil(N/128) — dense negative-CE buffer
    bx = boxes_ref[0]                       # (n_obj, 4)
    n_obj = bx.shape[0]
    N = priors_ref.shape[1]
    R = neg_ref.shape[0]

    b_xmin = bx[:, 0:1]
    b_ymin = bx[:, 1:2]
    b_xmax = bx[:, 2:3]
    b_ymax = bx[:, 3:4]                     # (n_obj, 1)

    p_xmin = priors_ref[0:1, :]
    p_ymin = priors_ref[1:2, :]
    p_xmax = priors_ref[2:3, :]
    p_ymax = priors_ref[3:4, :]
    p_cx = priors_ref[4:5, :]
    p_cy = priors_ref[5:6, :]
    p_w = priors_ref[6:7, :]
    p_h = priors_ref[7:8, :]                # (1, N)

    # ---- Jaccard overlap: (n_obj, N) ----
    ix = jnp.maximum(jnp.minimum(b_xmax, p_xmax) - jnp.maximum(b_xmin, p_xmin), 0.0)
    iy = jnp.maximum(jnp.minimum(b_ymax, p_ymax) - jnp.maximum(b_ymin, p_ymin), 0.0)
    inter = ix * iy
    area_b = (b_xmax - b_xmin) * (b_ymax - b_ymin)       # (n_obj, 1)
    area_p = (p_xmax - p_xmin) * (p_ymax - p_ymin)       # (1, N)
    overlap = inter / (area_b + area_p - inter)          # (n_obj, N)

    obj_iota = jax.lax.broadcasted_iota(jnp.int32, (n_obj, N), 0)
    pri_iota = jax.lax.broadcasted_iota(jnp.int32, (n_obj, N), 1)

    # best object for each prior (first-argmax over objects)
    ov_best = jnp.max(overlap, axis=0, keepdims=True)                              # (1, N)
    obj_best = jnp.min(jnp.where(overlap == ov_best, obj_iota, n_obj),
                       axis=0, keepdims=True)                                      # (1, N)

    # best prior for each object (first-argmax over priors)
    row_max = jnp.max(overlap, axis=1, keepdims=True)                              # (n_obj, 1)
    prior_for_obj = jnp.min(jnp.where(overlap == row_max, pri_iota, N),
                            axis=1, keepdims=True)                                 # (n_obj, 1)

    # forced assignment: object_for_each_prior[prior_for_each_object] = range(n_obj)
    # (torch writes in increasing object order -> duplicates: last write / max index wins)
    match = (pri_iota == prior_for_obj)                                            # (n_obj, N)
    forced_obj = jnp.max(jnp.where(match, obj_iota, -1), axis=0, keepdims=True)    # (1, N)
    forced = forced_obj >= 0
    obj_for_prior = jnp.where(forced, forced_obj, obj_best)                        # (1, N)
    ov_for_prior = jnp.where(forced, 1.0, ov_best)                                 # (1, N)

    # ---- gather matched box corners + label with ONE MXU matmul (review item) ----
    gt = gt_ref[0]                                                                 # (16, K)
    K = gt.shape[1]
    obj_iota_k = jax.lax.broadcasted_iota(jnp.int32, (K, N), 0)
    one_hot = (obj_iota_k == obj_for_prior).astype(jnp.float32)                    # (K, N)
    gath16 = jnp.dot(gt, one_hot, preferred_element_type=jnp.float32)              # (16, N)
    gath = gath16[0:8, :] + gath16[8:16, :]   # hi + lo residual -> exact f32 gather

    mb_xmin = gath[0:1, :]
    mb_ymin = gath[1:2, :]
    mb_xmax = gath[2:3, :]
    mb_ymax = gath[3:4, :]
    label_for_prior = (gath[4:5, :] + 0.5).astype(jnp.int32)                       # (1, N)
    label_for_prior = jnp.where(ov_for_prior < threshold, 0, label_for_prior)
    positive = (label_for_prior != 0)
    pos_f = positive.astype(jnp.float32)

    # xy -> cxcy of matched boxes, then cxcy -> gcxgcy encoding wrt priors
    cx = (mb_xmin + mb_xmax) * 0.5
    cy = (mb_ymin + mb_ymax) * 0.5
    w = mb_xmax - mb_xmin
    h = mb_ymax - mb_ymin
    g_cx = (cx - p_cx) * 10.0 / p_w
    g_cy = (cy - p_cy) * 10.0 / p_h
    g_w = jnp.log(w / p_w) * 5.0
    g_h = jnp.log(h / p_h) * 5.0

    # masked L1 localization sum; where() (not *mask) so inf/NaN from degenerate
    # boxes on non-positive priors cannot poison the sum
    pred = locs_ref[0].astype(jnp.float32)                                         # (4, N)
    loc_abs = (jnp.abs(pred[0:1, :] - g_cx) + jnp.abs(pred[1:2, :] - g_cy) +
               jnp.abs(pred[2:3, :] - g_w) + jnp.abs(pred[3:4, :] - g_h))          # (1, N)
    loc_sum = jnp.sum(jnp.where(positive, loc_abs, 0.0), axis=1, keepdims=True)    # (1, 1)

    # per-prior cross-entropy (class-major: exp/log on EUP, class reduce on XLU)
    scores = scores_ref[0].astype(jnp.float32)                                     # (C, N)
    C = scores.shape[0]
    m = jnp.max(scores, axis=0, keepdims=True)
    lse = m + jnp.log(jnp.sum(jnp.exp(scores - m), axis=0, keepdims=True))         # (1, N)
    cls_iota = jax.lax.broadcasted_iota(jnp.int32, (C, N), 0)
    true_score = jnp.sum(jnp.where(cls_iota == label_for_prior, scores, 0.0),
                         axis=0, keepdims=True)                                    # (1, N)
    conf_all = lse - true_score                                                    # (1, N)

    n_pos = jnp.sum(pos_f, axis=1, keepdims=True)                                  # (1, 1)
    conf_pos_sum = jnp.sum(jnp.where(positive, conf_all, 0.0),
                           axis=1, keepdims=True)                                  # (1, 1)

    # ---- hard-negative mining: sum of top-k negative CE values (k = 3*n_pos) ----
    # clamp keeps the int32 bit pattern monotone in the value (>= +0.0 invariant)
    conf_neg = jnp.where(positive, 0.0, jnp.maximum(conf_all, 0.0))                # (1, N)

    # densify to (R, 128) in VMEM scratch (review item: sublane-dense mining loop);
    # padding lanes are 0 and never affect counts for candidates >= 1 nor the sums.
    if N % 128 != 0:
        neg_ref[R - 1:R, :] = jnp.zeros((1, 128), jnp.float32)
    for r in range(R):
        start = r * 128
        width = min(128, N - start)
        neg_ref[r:r + 1, 0:width] = conf_neg[:, start:start + width]

    kq = jnp.ceil(neg_pos_ratio * n_pos)                                           # (1, 1)

    neg_dense = neg_ref[...]                                                       # (R, 128)
    bits = pltpu.bitcast(neg_dense, jnp.int32)

    def _sum11(x):  # (R, 128) -> (1, 1): sublane adds then one lane reduce
        return jnp.sum(jnp.sum(x, axis=0, keepdims=True), axis=1, keepdims=True)

    # exact k-th largest via 31-step MSB-first search on the float bit pattern
    thr = jnp.zeros((1, 1), jnp.int32)
    for b in range(30, -1, -1):
        cand = thr + (1 << b)
        cnt = _sum11((bits >= cand).astype(jnp.float32))
        thr = jnp.where(cnt >= kq, cand, thr)
    kth = pltpu.bitcast(thr, jnp.float32)                                          # (1, 1)

    above = neg_dense > kth
    sum_above = _sum11(jnp.where(above, neg_dense, 0.0))
    cnt_above = _sum11(above.astype(jnp.float32))
    ties = jnp.where(cnt_above < kq, (kq - cnt_above) * kth, 0.0)
    hard_sum = jnp.where(kq > 0.0, sum_above + ties, 0.0)                          # (1, 1)

    # single lane-dense stats row: [n_pos, conf_pos_sum, hard_sum, loc_sum, 0...]
    lane = jax.lax.broadcasted_iota(jnp.int32, (1, 128), 1)
    stats_ref[0] = (jnp.where(lane == 0, n_pos, 0.0)
                    + jnp.where(lane == 1, conf_pos_sum, 0.0)
                    + jnp.where(lane == 2, hard_sum, 0.0)
                    + jnp.where(lane == 3, loc_sum, 0.0))


def multibox_loss(pred_locs, pred_scores, boxes, labels, priors_cxcy,
                  threshold=0.5, neg_pos_ratio=3.0, alpha=1.0):
    B, N, _ = pred_locs.shape
    C = pred_scores.shape[2]
    n_obj = boxes.shape[1]
    assert pred_scores.shape[1] == N and priors_cxcy.shape[0] == N

    priors_cxcy = priors_cxcy.astype(jnp.float32)
    priors_xy = jnp.concatenate([priors_cxcy[:, :2] - priors_cxcy[:, 2:] / 2.0,
                                 priors_cxcy[:, :2] + priors_cxcy[:, 2:] / 2.0], axis=1)
    # single dense (8, N) priors input: rows 0-3 xy, rows 4-7 cxcy
    priors_pack = jnp.concatenate([priors_xy.T, priors_cxcy.T], axis=0)

    # prior-major network outputs; input dtype preserved (cast in-kernel after load)
    locs_t = jnp.transpose(pred_locs, (0, 2, 1))        # (B, 4, N)
    scores_t = jnp.transpose(pred_scores, (0, 2, 1))    # (B, C, N)
    # TODO(synk): scores transpose is still an HBM round trip of the largest tensor
    # (see header) — needs an in-kernel relayout to remove.

    boxes = boxes.astype(jnp.float32)
    K = ((n_obj + 7) // 8) * 8
    gt = jnp.concatenate([jnp.transpose(boxes, (0, 2, 1)),                 # (B, 4, n_obj)
                          labels[:, None, :].astype(jnp.float32),          # (B, 1, n_obj)
                          jnp.zeros((B, 3, n_obj), jnp.float32)], axis=1)  # (B, 8, n_obj)
    gt = jnp.pad(gt, ((0, 0), (0, 0), (0, K - n_obj)))                     # (B, 8, K)
    # hi/lo split keeps the MXU gather exact regardless of f32-matmul pass count
    gt_hi = gt.astype(jnp.bfloat16).astype(jnp.float32)
    gt_lo = gt - gt_hi
    gt_pack = jnp.concatenate([gt_hi, gt_lo], axis=1)                      # (B, 16, K)

    R = -(-N // 128)   # dense rows of the negative-CE scratch

    kernel = functools.partial(_multibox_kernel, threshold=threshold,
                               neg_pos_ratio=neg_pos_ratio)

    stats = pl.pallas_call(
        kernel,
        out_shape=jax.ShapeDtypeStruct((B, 1, 128), jnp.float32),
        grid_spec=pltpu.PrefetchScalarGridSpec(
            num_scalar_prefetch=0,
            grid=(B,),
            in_specs=[
                pl.BlockSpec((1, 16, K), lambda i: (i, 0, 0)),      # packed GT hi/lo
                pl.BlockSpec((1, n_obj, 4), lambda i: (i, 0, 0)),   # boxes (for IoU)
                pl.BlockSpec((1, 4, N), lambda i: (i, 0, 0)),       # predicted locs
                # NOTE: if the per-step scores DMA becomes exposed on v6e, add
                # pipeline_mode=pl.Buffered(3) here.
                pl.BlockSpec((1, C, N), lambda i: (i, 0, 0)),       # predicted scores
                pl.BlockSpec((8, N), lambda i: (0, 0)),             # packed priors
            ],
            out_specs=pl.BlockSpec((1, 1, 128), lambda i: (i, 0, 0)),
            scratch_shapes=[pltpu.VMEM((R, 128), jnp.float32)],
        ),
        compiler_params=pltpu.CompilerParams(
            dimension_semantics=("parallel",),
            vmem_limit_bytes=32 * 1024 * 1024),
    )(gt_pack, boxes, locs_t, scores_t, priors_pack)

    # tiny scalar glue over the (B, 4) stats slab
    totals = jnp.sum(stats[:, 0, :4], axis=0)          # [n_pos, conf_pos, hard, loc]
    n_pos_total = totals[0]
    # guard only changes the degenerate all-background case (reference is NaN there)
    denom = jnp.maximum(n_pos_total, 1.0)
    conf_loss = (totals[2] + totals[1]) / denom
    loc_loss = totals[3] / (4.0 * denom)                # nn.L1Loss mean over (n_pos, 4)
    return conf_loss + alpha * loc_loss


# ---------------- pure-JAX reference (for verification only) ----------------
def reference_loss(pred_locs, pred_scores, boxes, labels, priors_cxcy,
                   threshold=0.5, neg_pos_ratio=3.0, alpha=1.0):
    B, N, _ = pred_locs.shape
    priors_xy = jnp.concatenate([priors_cxcy[:, :2] - priors_cxcy[:, 2:] / 2.0,
                                 priors_cxcy[:, :2] + priors_cxcy[:, 2:] / 2.0], axis=1)
    true_locs, true_cls = [], []
    for i in range(B):
        bx = boxes[i]
        n_obj = bx.shape[0]
        lt = jnp.maximum(bx[:, None, :2], priors_xy[None, :, :2])
        rb = jnp.minimum(bx[:, None, 2:], priors_xy[None, :, 2:])
        wh = jnp.maximum(rb - lt, 0.0)
        inter = wh[..., 0] * wh[..., 1]
        area_b = (bx[:, 2] - bx[:, 0]) * (bx[:, 3] - bx[:, 1])
        area_p = (priors_xy[:, 2] - priors_xy[:, 0]) * (priors_xy[:, 3] - priors_xy[:, 1])
        overlap = inter / (area_b[:, None] + area_p[None, :] - inter)
        ov_p = jnp.max(overlap, axis=0)
        obj_p = jnp.argmax(overlap, axis=0)
        pr_o = jnp.argmax(overlap, axis=1)
        for o in range(n_obj):  # sequential updates: duplicate priors -> last write wins
            obj_p = obj_p.at[pr_o[o]].set(o)
            ov_p = ov_p.at[pr_o[o]].set(1.0)
        lab_p = labels[i][obj_p]
        lab_p = jnp.where(ov_p < threshold, 0, lab_p)
        matched = bx[obj_p]
        cxcy = jnp.concatenate([(matched[:, :2] + matched[:, 2:]) / 2.0,
                                matched[:, 2:] - matched[:, :2]], axis=1)
        g = jnp.concatenate([(cxcy[:, :2] - priors_cxcy[:, :2]) / (priors_cxcy[:, 2:] / 10.0),
                             jnp.log(cxcy[:, 2:] / priors_cxcy[:, 2:]) * 5.0], axis=1)
        true_locs.append(g)
        true_cls.append(lab_p)
    true_locs = jnp.stack(true_locs)
    true_cls = jnp.stack(true_cls).astype(jnp.int32)
    pos = (true_cls != 0)
    n_pos = pos.sum(axis=1)
    loc_loss = jnp.sum(jnp.abs(pred_locs - true_locs) * pos[..., None].astype(jnp.float32)) \
        / (4.0 * n_pos.sum())
    lse = jax.nn.logsumexp(pred_scores, axis=-1)
    true_s = jnp.take_along_axis(pred_scores, true_cls[..., None], axis=-1)[..., 0]
    ce = lse - true_s
    conf_pos = jnp.sum(jnp.where(pos, ce, 0.0))
    ce_neg = jnp.where(pos, 0.0, ce)
    ce_sorted = -jnp.sort(-ce_neg, axis=1)
    ranks = jnp.arange(N)[None, :]
    hard = jnp.sum(jnp.where(ranks < (neg_pos_ratio * n_pos)[:, None], ce_sorted, 0.0))
    conf_loss = (hard + conf_pos) / n_pos.sum()
    return conf_loss + alpha * loc_loss


if __name__ == "__main__":
    B, N, C, n_obj = 2, 256, 8, 4
    key = jax.random.PRNGKey(0)
    k1, k2, k3, k4, k5, k6 = jax.random.split(key, 6)

    # deterministic "parameters": prior boxes in cxcy format
    p_c = jax.random.uniform(k1, (N, 2), minval=0.1, maxval=0.9)
    p_wh = jax.random.uniform(k2, (N, 2), minval=0.05, maxval=0.4)
    priors_cxcy = jnp.concatenate([p_c, p_wh], axis=1).astype(jnp.float32)

    # synthetic ground truth: boxes in xy format, labels in [1, C-1]
    g_c = jax.random.uniform(k3, (B, n_obj, 2), minval=0.3, maxval=0.7)
    g_wh = jax.random.uniform(k4, (B, n_obj, 2), minval=0.1, maxval=0.4)
    boxes = jnp.concatenate([g_c - g_wh / 2.0, g_c + g_wh / 2.0], axis=-1).astype(jnp.float32)
    labels = jax.random.randint(k5, (B, n_obj), 1, C).astype(jnp.int32)

    # network outputs
    pred_locs = jax.random.normal(k6, (B, N, 4), dtype=jnp.float32)
    pred_scores = jax.random.normal(jax.random.PRNGKey(1), (B, N, C), dtype=jnp.float32)

    loss = multibox_loss(pred_locs, pred_scores, boxes, labels, priors_cxcy,
                         threshold=0.5, neg_pos_ratio=3.0, alpha=1.0)
    loss = jax.block_until_ready(loss)

    ref = reference_loss(pred_locs, pred_scores, boxes, labels, priors_cxcy,
                         threshold=0.5, neg_pos_ratio=3.0, alpha=1.0)
    assert bool(jnp.isfinite(loss)), "loss is not finite"
    assert abs(float(loss) - float(ref)) < 1e-3 * max(1.0, abs(float(ref))), (float(loss), float(ref))
    print("KERNEL_OK")
</pallas_src>

<mosaic_0001>
module attributes {stable_mosaic.version = 11 : i64} {
  func.func @_multibox_kernel(%arg0: i32, %arg1: memref<1x16x8xf32, #tpu.memory_space<vmem>>, %arg2: memref<1x4x4xf32, #tpu.memory_space<vmem>>, %arg3: memref<1x4x256xf32, #tpu.memory_space<vmem>>, %arg4: memref<1x8x256xf32, #tpu.memory_space<vmem>>, %arg5: memref<8x256xf32, #tpu.memory_space<vmem>>, %arg6: memref<1x1x128xf32, #tpu.memory_space<vmem>>, %arg7: memref<2x128xf32, #tpu.memory_space<vmem>>) attributes {dimension_semantics = [#tpu.dimension_semantics<parallel>], iteration_bounds = array<i64: 2>, scalar_prefetch = 0 : i64, scratch_operands = 1 : i64, tpu.core_type = #tpu.core_type<tc>, window_params = [{transform_indices = @transform_0, window_bounds = array<i64: 1, 16, 8>}, {transform_indices = @transform_1, window_bounds = array<i64: 1, 4, 4>}, {transform_indices = @transform_2, window_bounds = array<i64: 1, 4, 256>}, {transform_indices = @transform_3, window_bounds = array<i64: 1, 8, 256>}, {pipeline_mode = #tpu.pipeline_mode<synchronous>, transform_indices = @transform_4, window_bounds = array<i64: 8, 256>}, {transform_indices = @transform_5, window_bounds = array<i64: 1, 1, 128>}]} {
    %c0 = arith.constant 0 : index
    %c0_0 = arith.constant 0 : index
    %c0_1 = arith.constant 0 : index
    %0 = vector.load %arg2[%c0, %c0_0, %c0_1] : memref<1x4x4xf32, #tpu.memory_space<vmem>>, vector<1x4x4xf32>
    %1 = vector.shape_cast %0 : vector<1x4x4xf32> to vector<4x4xf32>
    %2 = vector.extract_strided_slice %1 {offsets = [0, 0], sizes = [4, 1], strides = [1, 1]} : vector<4x4xf32> to vector<4x1xf32>
    %3 = vector.extract_strided_slice %1 {offsets = [0, 1], sizes = [4, 1], strides = [1, 1]} : vector<4x4xf32> to vector<4x1xf32>
    %4 = vector.extract_strided_slice %1 {offsets = [0, 2], sizes = [4, 1], strides = [1, 1]} : vector<4x4xf32> to vector<4x1xf32>
    %5 = vector.extract_strided_slice %1 {offsets = [0, 3], sizes = [4, 1], strides = [1, 1]} : vector<4x4xf32> to vector<4x1xf32>
    %c0_2 = arith.constant 0 : index
    %c0_3 = arith.constant 0 : index
    %6 = vector.load %arg5[%c0_2, %c0_3] : memref<8x256xf32, #tpu.memory_space<vmem>>, vector<1x256xf32>
    %c1 = arith.constant 1 : index
    %c0_4 = arith.constant 0 : index
    %7 = vector.load %arg5[%c1, %c0_4] : memref<8x256xf32, #tpu.memory_space<vmem>>, vector<1x256xf32>
    %c2 = arith.constant 2 : index
    %c0_5 = arith.constant 0 : index
    %8 = vector.load %arg5[%c2, %c0_5] : memref<8x256xf32, #tpu.memory_space<vmem>>, vector<1x256xf32>
    %c3 = arith.constant 3 : index
    %c0_6 = arith.constant 0 : index
    %9 = vector.load %arg5[%c3, %c0_6] : memref<8x256xf32, #tpu.memory_space<vmem>>, vector<1x256xf32>
    %c4 = arith.constant 4 : index
    %c0_7 = arith.constant 0 : index
    %10 = vector.load %arg5[%c4, %c0_7] : memref<8x256xf32, #tpu.memory_space<vmem>>, vector<1x256xf32>
    %c5 = arith.constant 5 : index
    %c0_8 = arith.constant 0 : index
    %11 = vector.load %arg5[%c5, %c0_8] : memref<8x256xf32, #tpu.memory_space<vmem>>, vector<1x256xf32>
    %c6 = arith.constant 6 : index
    %c0_9 = arith.constant 0 : index
    %12 = vector.load %arg5[%c6, %c0_9] : memref<8x256xf32, #tpu.memory_space<vmem>>, vector<1x256xf32>
    %c7 = arith.constant 7 : index
    %c0_10 = arith.constant 0 : index
    %13 = vector.load %arg5[%c7, %c0_10] : memref<8x256xf32, #tpu.memory_space<vmem>>, vector<1x256xf32>
    %14 = vector.broadcast %4 : vector<4x1xf32> to vector<4x256xf32>
    %15 = vector.broadcast %8 : vector<1x256xf32> to vector<4x256xf32>
    %16 = arith.minimumf %14, %15 : vector<4x256xf32>
    %17 = vector.broadcast %2 : vector<4x1xf32> to vector<4x256xf32>
    %18 = vector.broadcast %6 : vector<1x256xf32> to vector<4x256xf32>
    %19 = arith.maximumf %17, %18 : vector<4x256xf32>
    %20 = arith.subf %16, %19 : vector<4x256xf32>
    %cst = arith.constant 0.000000e+00 : f32
    %21 = vector.broadcast %cst : f32 to vector<4x256xf32>
    %22 = arith.maximumf %20, %21 : vector<4x256xf32>
    %23 = vector.broadcast %5 : vector<4x1xf32> to vector<4x256xf32>
    %24 = vector.broadcast %9 : vector<1x256xf32> to vector<4x256xf32>
    %25 = arith.minimumf %23, %24 : vector<4x256xf32>
    %26 = vector.broadcast %3 : vector<4x1xf32> to vector<4x256xf32>
    %27 = vector.broadcast %7 : vector<1x256xf32> to vector<4x256xf32>
    %28 = arith.maximumf %26, %27 : vector<4x256xf32>
    %29 = arith.subf %25, %28 : vector<4x256xf32>
    %cst_11 = arith.constant 0.000000e+00 : f32
    %30 = vector.broadcast %cst_11 : f32 to vector<4x256xf32>
    %31 = arith.maximumf %29, %30 : vector<4x256xf32>
    %32 = arith.mulf %22, %31 : vector<4x256xf32>
    %33 = arith.subf %4, %2 : vector<4x1xf32>
    %34 = arith.subf %5, %3 : vector<4x1xf32>
    %35 = arith.mulf %33, %34 : vector<4x1xf32>
    %36 = arith.subf %8, %6 : vector<1x256xf32>
    %37 = arith.subf %9, %7 : vector<1x256xf32>
    %38 = arith.mulf %36, %37 : vector<1x256xf32>
    %39 = vector.broadcast %35 : vector<4x1xf32> to vector<4x256xf32>
    %40 = vector.broadcast %38 : vector<1x256xf32> to vector<4x256xf32>
    %41 = arith.addf %39, %40 : vector<4x256xf32>
    %42 = arith.subf %41, %32 : vector<4x256xf32>
    %43 = arith.divf %32, %42 : vector<4x256xf32>
    %44 = tpu.iota {dimensions = array<i32: 0>} : vector<4x256xi32>
    %45 = tpu.iota {dimensions = array<i32: 1>} : vector<4x256xi32>
    %cst_12 = arith.constant dense<0xFF800000> : vector<256xf32>
    %46 = vector.multi_reduction <maximumf>, %43, %cst_12 [0] : vector<4x256xf32> to vector<256xf32>
    %47 = vector.shape_cast %46 : vector<256xf32> to vector<1x256xf32>
    %48 = vector.broadcast %47 : vector<1x256xf32> to vector<4x256xf32>
    %49 = arith.cmpf oeq, %43, %48 : vector<4x256xf32>
    %c4_i32 = arith.constant 4 : i32
    %50 = vector.broadcast %c4_i32 : i32 to vector<4x256xi32>
    %51 = arith.select %49, %44, %50 : vector<4x256xi1>, vector<4x256xi32>
    %cst_13 = arith.constant dense<2147483647> : vector<256xi32>
    %52 = vector.multi_reduction <minsi>, %51, %cst_13 [0] : vector<4x256xi32> to vector<256xi32>
    %53 = vector.shape_cast %52 : vector<256xi32> to vector<1x256xi32>
    %cst_14 = arith.constant dense<0xFF800000> : vector<4xf32>
    %54 = vector.multi_reduction <maximumf>, %43, %cst_14 [1] : vector<4x256xf32> to vector<4xf32>
    %55 = vector.shape_cast %54 : vector<4xf32> to vector<4x1xf32>
    %56 = vector.broadcast %55 : vector<4x1xf32> to vector<4x256xf32>
    %57 = arith.cmpf oeq, %43, %56 : vector<4x256xf32>
    %c256_i32 = arith.constant 256 : i32
    %58 = vector.broadcast %c256_i32 : i32 to vector<4x256xi32>
    %59 = arith.select %57, %45, %58 : vector<4x256xi1>, vector<4x256xi32>
    %cst_15 = arith.constant dense<2147483647> : vector<4xi32>
    %60 = vector.multi_reduction <minsi>, %59, %cst_15 [1] : vector<4x256xi32> to vector<4xi32>
    %61 = vector.shape_cast %60 : vector<4xi32> to vector<4x1xi32>
    %62 = vector.broadcast %61 : vector<4x1xi32> to vector<4x256xi32>
    %63 = arith.cmpi eq, %45, %62 : vector<4x256xi32>
    %c-1_i32 = arith.constant -1 : i32
    %64 = vector.broadcast %c-1_i32 : i32 to vector<4x256xi32>
    %65 = arith.select %63, %44, %64 : vector<4x256xi1>, vector<4x256xi32>
    %cst_16 = arith.constant dense<-2147483648> : vector<256xi32>
    %66 = vector.multi_reduction <maxsi>, %65, %cst_16 [0] : vector<4x256xi32> to vector<256xi32>
    %67 = vector.shape_cast %66 : vector<256xi32> to vector<1x256xi32>
    %c0_i32 = arith.constant 0 : i32
    %68 = vector.broadcast %c0_i32 : i32 to vector<1x256xi32>
    %69 = arith.cmpi sge, %67, %68 : vector<1x256xi32>
    %70 = arith.select %69, %67, %53 : vector<1x256xi1>, vector<1x256xi32>
    %cst_17 = arith.constant 1.000000e+00 : f32
    %71 = vector.broadcast %cst_17 : f32 to vector<1x256xf32>
    %72 = arith.select %69, %71, %47 : vector<1x256xi1>, vector<1x256xf32>
    %c0_18 = arith.constant 0 : index
    %c0_19 = arith.constant 0 : index
    %c0_20 = arith.constant 0 : index
    %73 = vector.load %arg1[%c0_18, %c0_19, %c0_20] : memref<1x16x8xf32, #tpu.memory_space<vmem>>, vector<1x16x8xf32>
    %74 = vector.shape_cast %73 : vector<1x16x8xf32> to vector<16x8xf32>
    %75 = tpu.iota {dimensions = array<i32: 0>} : vector<8x256xi32>
    %76 = vector.broadcast %70 : vector<1x256xi32> to vector<8x256xi32>
    %77 = arith.cmpi eq, %75, %76 : vector<8x256xi32>
    %78 = arith.extui %77 : vector<8x256xi1> to vector<8x256xi32>
    %79 = arith.sitofp %78 : vector<8x256xi32> to vector<8x256xf32>
    %cst_21 = arith.constant dense<0.000000e+00> : vector<16x256xf32>
    %80 = tpu.matmul %74, %79, %cst_21 {dimension_numbers = #tpu.dot_dimension_numbers<[1], [0], [0], [1], [0, 0, 1, 1], [], []>} : vector<16x8xf32>, vector<8x256xf32>, vector<16x256xf32> -> vector<16x256xf32>
    %81 = vector.extract_strided_slice %80 {offsets = [0, 0], sizes = [8, 256], strides = [1, 1]} : vector<16x256xf32> to vector<8x256xf32>
    %82 = vector.extract_strided_slice %80 {offsets = [8, 0], sizes = [8, 256], strides = [1, 1]} : vector<16x256xf32> to vector<8x256xf32>
    %83 = arith.addf %81, %82 : vector<8x256xf32>
    %84 = vector.extract_strided_slice %83 {offsets = [0, 0], sizes = [1, 256], strides = [1, 1]} : vector<8x256xf32> to vector<1x256xf32>
    %85 = vector.extract_strided_slice %83 {offsets = [1, 0], sizes = [1, 256], strides = [1, 1]} : vector<8x256xf32> to vector<1x256xf32>
    %86 = vector.extract_strided_slice %83 {offsets = [2, 0], sizes = [1, 256], strides = [1, 1]} : vector<8x256xf32> to vector<1x256xf32>
    %87 = vector.extract_strided_slice %83 {offsets = [3, 0], sizes = [1, 256], strides = [1, 1]} : vector<8x256xf32> to vector<1x256xf32>
    %88 = vector.extract_strided_slice %83 {offsets = [4, 0], sizes = [1, 256], strides = [1, 1]} : vector<8x256xf32> to vector<1x256xf32>
    %cst_22 = arith.constant 5.000000e-01 : f32
    %89 = vector.broadcast %cst_22 : f32 to vector<1x256xf32>
    %90 = arith.addf %88, %89 : vector<1x256xf32>
    %91 = arith.fptosi %90 : vector<1x256xf32> to vector<1x256xi32>
    %cst_23 = arith.constant 5.000000e-01 : f32
    %92 = vector.broadcast %cst_23 : f32 to vector<1x256xf32>
    %93 = arith.cmpf olt, %72, %92 : vector<1x256xf32>
    %c0_i32_24 = arith.constant 0 : i32
    %94 = vector.broadcast %c0_i32_24 : i32 to vector<1x256xi32>
    %95 = arith.select %93, %94, %91 : vector<1x256xi1>, vector<1x256xi32>
    %c0_i32_25 = arith.constant 0 : i32
    %96 = vector.broadcast %c0_i32_25 : i32 to vector<1x256xi32>
    %97 = arith.cmpi ne, %95, %96 : vector<1x256xi32>
    %98 = arith.extui %97 : vector<1x256xi1> to vector<1x256xi32>
    %99 = arith.sitofp %98 : vector<1x256xi32> to vector<1x256xf32>
    %100 = arith.addf %84, %86 : vector<1x256xf32>
    %cst_26 = arith.constant 5.000000e-01 : f32
    %101 = vector.broadcast %cst_26 : f32 to vector<1x256xf32>
    %102 = arith.mulf %100, %101 : vector<1x256xf32>
    %103 = arith.addf %85, %87 : vector<1x256xf32>
    %cst_27 = arith.constant 5.000000e-01 : f32
    %104 = vector.broadcast %cst_27 : f32 to vector<1x256xf32>
    %105 = arith.mulf %103, %104 : vector<1x256xf32>
    %106 = arith.subf %86, %84 : vector<1x256xf32>
    %107 = arith.subf %87, %85 : vector<1x256xf32>
    %108 = arith.subf %102, %10 : vector<1x256xf32>
    %cst_28 = arith.constant 1.000000e+01 : f32
    %109 = vector.broadcast %cst_28 : f32 to vector<1x256xf32>
    %110 = arith.mulf %108, %109 : vector<1x256xf32>
    %111 = arith.divf %110, %12 : vector<1x256xf32>
    %112 = arith.subf %105, %11 : vector<1x256xf32>
    %cst_29 = arith.constant 1.000000e+01 : f32
    %113 = vector.broadcast %cst_29 : f32 to vector<1x256xf32>
    %114 = arith.mulf %112, %113 : vector<1x256xf32>
    %115 = arith.divf %114, %13 : vector<1x256xf32>
    %116 = arith.divf %106, %12 : vector<1x256xf32>
    %117 = math.log %116 : vector<1x256xf32>
    %cst_30 = arith.constant 5.000000e+00 : f32
    %118 = vector.broadcast %cst_30 : f32 to vector<1x256xf32>
    %119 = arith.mulf %117, %118 : vector<1x256xf32>
    %120 = arith.divf %107, %13 : vector<1x256xf32>
    %121 = math.log %120 : vector<1x256xf32>
    %cst_31 = arith.constant 5.000000e+00 : f32
    %122 = vector.broadcast %cst_31 : f32 to vector<1x256xf32>
    %123 = arith.mulf %121, %122 : vector<1x256xf32>
    %c0_32 = arith.constant 0 : index
    %c0_33 = arith.constant 0 : index
    %c0_34 = arith.constant 0 : index
    %124 = vector.load %arg3[%c0_32, %c0_33, %c0_34] : memref<1x4x256xf32, #tpu.memory_space<vmem>>, vector<1x4x256xf32>
    %125 = vector.shape_cast %124 : vector<1x4x256xf32> to vector<4x256xf32>
    %126 = vector.extract_strided_slice %125 {offsets = [0, 0], sizes = [1, 256], strides = [1, 1]} : vector<4x256xf32> to vector<1x256xf32>
    %127 = arith.subf %126, %111 : vector<1x256xf32>
    %128 = math.absf %127 : vector<1x256xf32>
    %129 = vector.extract_strided_slice %125 {offsets = [1, 0], sizes = [1, 256], strides = [1, 1]} : vector<4x256xf32> to vector<1x256xf32>
    %130 = arith.subf %129, %115 : vector<1x256xf32>
    %131 = math.absf %130 : vector<1x256xf32>
    %132 = arith.addf %128, %131 : vector<1x256xf32>
    %133 = vector.extract_strided_slice %125 {offsets = [2, 0], sizes = [1, 256], strides = [1, 1]} : vector<4x256xf32> to vector<1x256xf32>
    %134 = arith.subf %133, %119 : vector<1x256xf32>
    %135 = math.absf %134 : vector<1x256xf32>
    %136 = arith.addf %132, %135 : vector<1x256xf32>
    %137 = vector.extract_strided_slice %125 {offsets = [3, 0], sizes = [1, 256], strides = [1, 1]} : vector<4x256xf32> to vector<1x256xf32>
    %138 = arith.subf %137, %123 : vector<1x256xf32>
    %139 = math.absf %138 : vector<1x256xf32>
    %140 = arith.addf %136, %139 : vector<1x256xf32>
    %cst_35 = arith.constant 0.000000e+00 : f32
    %141 = vector.broadcast %cst_35 : f32 to vector<1x256xf32>
    %142 = arith.select %97, %140, %141 : vector<1x256xi1>, vector<1x256xf32>
    %cst_36 = arith.constant dense<0.000000e+00> : vector<1xf32>
    %143 = vector.multi_reduction <add>, %142, %cst_36 [1] : vector<1x256xf32> to vector<1xf32>
    %144 = vector.shape_cast %143 : vector<1xf32> to vector<1x1xf32>
    %c0_37 = arith.constant 0 : index
    %c0_38 = arith.constant 0 : index
    %c0_39 = arith.constant 0 : index
    %145 = vector.load %arg4[%c0_37, %c0_38, %c0_39] : memref<1x8x256xf32, #tpu.memory_space<vmem>>, vector<1x8x256xf32>
    %146 = vector.shape_cast %145 : vector<1x8x256xf32> to vector<8x256xf32>
    %cst_40 = arith.constant dense<0xFF800000> : vector<256xf32>
    %147 = vector.multi_reduction <maximumf>, %146, %cst_40 [0] : vector<8x256xf32> to vector<256xf32>
    %148 = vector.shape_cast %147 : vector<256xf32> to vector<1x256xf32>
    %149 = vector.broadcast %148 : vector<1x256xf32> to vector<8x256xf32>
    %150 = arith.subf %146, %149 : vector<8x256xf32>
    %151 = math.exp %150 : vector<8x256xf32>
    %cst_41 = arith.constant dense<0.000000e+00> : vector<256xf32>
    %152 = vector.multi_reduction <add>, %151, %cst_41 [0] : vector<8x256xf32> to vector<256xf32>
    %153 = vector.shape_cast %152 : vector<256xf32> to vector<1x256xf32>
    %154 = math.log %153 : vector<1x256xf32>
    %155 = arith.addf %148, %154 : vector<1x256xf32>
    %156 = tpu.iota {dimensions = array<i32: 0>} : vector<8x256xi32>
    %157 = vector.broadcast %95 : vector<1x256xi32> to vector<8x256xi32>
    %158 = arith.cmpi eq, %156, %157 : vector<8x256xi32>
    %cst_42 = arith.constant 0.000000e+00 : f32
    %159 = vector.broadcast %cst_42 : f32 to vector<8x256xf32>
    %160 = arith.select %158, %146, %159 : vector<8x256xi1>, vector<8x256xf32>
    %cst_43 = arith.constant dense<0.000000e+00> : vector<256xf32>
    %161 = vector.multi_reduction <add>, %160, %cst_43 [0] : vector<8x256xf32> to vector<256xf32>
    %162 = vector.shape_cast %161 : vector<256xf32> to vector<1x256xf32>
    %163 = arith.subf %155, %162 : vector<1x256xf32>
    %cst_44 = arith.constant dense<0.000000e+00> : vector<1xf32>
    %164 = vector.multi_reduction <add>, %99, %cst_44 [1] : vector<1x256xf32> to vector<1xf32>
    %165 = vector.shape_cast %164 : vector<1xf32> to vector<1x1xf32>
    %cst_45 = arith.constant 0.000000e+00 : f32
    %166 = vector.broadcast %cst_45 : f32 to vector<1x256xf32>
    %167 = arith.select %97, %163, %166 : vector<1x256xi1>, vector<1x256xf32>
    %cst_46 = arith.constant dense<0.000000e+00> : vector<1xf32>
    %168 = vector.multi_reduction <add>, %167, %cst_46 [1] : vector<1x256xf32> to vector<1xf32>
    %169 = vector.shape_cast %168 : vector<1xf32> to vector<1x1xf32>
    %cst_47 = arith.constant 0.000000e+00 : f32
    %170 = vector.broadcast %cst_47 : f32 to vector<1x256xf32>
    %171 = arith.maximumf %163, %170 : vector<1x256xf32>
    %cst_48 = arith.constant 0.000000e+00 : f32
    %172 = vector.broadcast %cst_48 : f32 to vector<1x256xf32>
    %173 = arith.select %97, %172, %171 : vector<1x256xi1>, vector<1x256xf32>
    %174 = vector.extract_strided_slice %173 {offsets = [0, 0], sizes = [1, 128], strides = [1, 1]} : vector<1x256xf32> to vector<1x128xf32>
    %c0_49 = arith.constant 0 : index
    %c0_50 = arith.constant 0 : index
    %175 = vector.load %arg7[%c0_49, %c0_50] : memref<2x128xf32, #tpu.memory_space<vmem>>, vector<1x128xf32>
    tpu.vector_store %arg7[%c0_49, %c0_50], %174 {strides = array<i32>} : memref<2x128xf32, #tpu.memory_space<vmem>>, vector<1x128xf32>,
    %176 = vector.extract_strided_slice %173 {offsets = [0, 128], sizes = [1, 128], strides = [1, 1]} : vector<1x256xf32> to vector<1x128xf32>
    %c1_51 = arith.constant 1 : index
    %c0_52 = arith.constant 0 : index
    %177 = vector.load %arg7[%c1_51, %c0_52] : memref<2x128xf32, #tpu.memory_space<vmem>>, vector<1x128xf32>
    tpu.vector_store %arg7[%c1_51, %c0_52], %176 {strides = array<i32>} : memref<2x128xf32, #tpu.memory_space<vmem>>, vector<1x128xf32>,
    %cst_53 = arith.constant 3.000000e+00 : f32
    %178 = vector.broadcast %cst_53 : f32 to vector<1x1xf32>
    %179 = arith.mulf %178, %165 : vector<1x1xf32>
    %180 = math.ceil %179 : vector<1x1xf32>
    %c0_54 = arith.constant 0 : index
    %c0_55 = arith.constant 0 : index
    %181 = vector.load %arg7[%c0_54, %c0_55] : memref<2x128xf32, #tpu.memory_space<vmem>>, vector<2x128xf32>
    %182 = tpu.bitcast %181 : vector<2x128xf32> -> vector<2x128xi32>
    %c0_i32_56 = arith.constant 0 : i32
    %183 = vector.broadcast %c0_i32_56 : i32 to vector<1x1xi32>
    %c1073741824_i32 = arith.constant 1073741824 : i32
    %184 = vector.broadcast %c1073741824_i32 : i32 to vector<1x1xi32>
    %185 = arith.addi %183, %184 : vector<1x1xi32>
    %186 = vector.broadcast %185 : vector<1x1xi32> to vector<2x128xi32>
    %187 = arith.cmpi sge, %182, %186 : vector<2x128xi32>
    %188 = arith.extui %187 : vector<2x128xi1> to vector<2x128xi32>
    %189 = arith.sitofp %188 : vector<2x128xi32> to vector<2x128xf32>
    %cst_57 = arith.constant dense<0.000000e+00> : vector<128xf32>
    %190 = vector.multi_reduction <add>, %189, %cst_57 [0] : vector<2x128xf32> to vector<128xf32>
    %191 = vector.shape_cast %190 : vector<128xf32> to vector<1x128xf32>
    %cst_58 = arith.constant dense<0.000000e+00> : vector<1xf32>
    %192 = vector.multi_reduction <add>, %191, %cst_58 [1] : vector<1x128xf32> to vector<1xf32>
    %193 = vector.shape_cast %192 : vector<1xf32> to vector<1x1xf32>
    %194 = arith.cmpf oge, %193, %180 : vector<1x1xf32>
    %195 = arith.select %194, %185, %183 : vector<1x1xi1>, vector<1x1xi32>
    %c536870912_i32 = arith.constant 536870912 : i32
    %196 = vector.broadcast %c536870912_i32 : i32 to vector<1x1xi32>
    %197 = arith.addi %195, %196 : vector<1x1xi32>
    %198 = vector.broadcast %197 : vector<1x1xi32> to vector<2x128xi32>
    %199 = arith.cmpi sge, %182, %198 : vector<2x128xi32>
    %200 = arith.extui %199 : vector<2x128xi1> to vector<2x128xi32>
    %201 = arith.sitofp %200 : vector<2x128xi32> to vector<2x128xf32>
    %cst_59 = arith.constant dense<0.000000e+00> : vector<128xf32>
    %202 = vector.multi_reduction <add>, %201, %cst_59 [0] : vector<2x128xf32> to vector<128xf32>
    %203 = vector.shape_cast %202 : vector<128xf32> to vector<1x128xf32>
    %cst_60 = arith.constant dense<0.000000e+00> : vector<1xf32>
    %204 = vector.multi_reduction <add>, %203, %cst_60 [1] : vector<1x128xf32> to vector<1xf32>
    %205 = vector.shape_cast %204 : vector<1xf32> to vector<1x1xf32>
    %206 = arith.cmpf oge, %205, %180 : vector<1x1xf32>
    %207 = arith.select %206, %197, %195 : vector<1x1xi1>, vector<1x1xi32>
    %c268435456_i32 = arith.constant 268435456 : i32
    %208 = vector.broadcast %c268435456_i32 : i32 to vector<1x1xi32>
    %209 = arith.addi %207, %208 : vector<1x1xi32>
    %210 = vector.broadcast %209 : vector<1x1xi32> to vector<2x128xi32>
    %211 = arith.cmpi sge, %182, %210 : vector<2x128xi32>
    %212 = arith.extui %211 : vector<2x128xi1> to vector<2x128xi32>
    %213 = arith.sitofp %212 : vector<2x128xi32> to vector<2x128xf32>
    %cst_61 = arith.constant dense<0.000000e+00> : vector<128xf32>
    %214 = vector.multi_reduction <add>, %213, %cst_61 [0] : vector<2x128xf32> to vector<128xf32>
    %215 = vector.shape_cast %214 : vector<128xf32> to vector<1x128xf32>
    %cst_62 = arith.constant dense<0.000000e+00> : vector<1xf32>
    %216 = vector.multi_reduction <add>, %215, %cst_62 [1] : vector<1x128xf32> to vector<1xf32>
    %217 = vector.shape_cast %216 : vector<1xf32> to vector<1x1xf32>
    %218 = arith.cmpf oge, %217, %180 : vector<1x1xf32>
    %219 = arith.select %218, %209, %207 : vector<1x1xi1>, vector<1x1xi32>
    %c134217728_i32 = arith.constant 134217728 : i32
    %220 = vector.broadcast %c134217728_i32 : i32 to vector<1x1xi32>
    %221 = arith.addi %219, %220 : vector<1x1xi32>
    %222 = vector.broadcast %221 : vector<1x1xi32> to vector<2x128xi32>
    %223 = arith.cmpi sge, %182, %222 : vector<2x128xi32>
    %224 = arith.extui %223 : vector<2x128xi1> to vector<2x128xi32>
    %225 = arith.sitofp %224 : vector<2x128xi32> to vector<2x128xf32>
    %cst_63 = arith.constant dense<0.000000e+00> : vector<128xf32>
    %226 = vector.multi_reduction <add>, %225, %cst_63 [0] : vector<2x128xf32> to vector<128xf32>
    %227 = vector.shape_cast %226 : vector<128xf32> to vector<1x128xf32>
    %cst_64 = arith.constant dense<0.000000e+00> : vector<1xf32>
    %228 = vector.multi_reduction <add>, %227, %cst_64 [1] : vector<1x128xf32> to vector<1xf32>
    %229 = vector.shape_cast %228 : vector<1xf32> to vector<1x1xf32>
    %230 = arith.cmpf oge, %229, %180 : vector<1x1xf32>
    %231 = arith.select %230, %221, %219 : vector<1x1xi1>, vector<1x1xi32>
    %c67108864_i32 = arith.constant 67108864 : i32
    %232 = vector.broadcast %c67108864_i32 : i32 to vector<1x1xi32>
    %233 = arith.addi %231, %232 : vector<1x1xi32>
    %234 = vector.broadcast %233 : vector<1x1xi32> to vector<2x128xi32>
    %235 = arith.cmpi sge, %182, %234 : vector<2x128xi32>
    %236 = arith.extui %235 : vector<2x128xi1> to vector<2x128xi32>
    %237 = arith.sitofp %236 : vector<2x128xi32> to vector<2x128xf32>
    %cst_65 = arith.constant dense<0.000000e+00> : vector<128xf32>
    %238 = vector.multi_reduction <add>, %237, %cst_65 [0] : vector<2x128xf32> to vector<128xf32>
    %239 = vector.shape_cast %238 : vector<128xf32> to vector<1x128xf32>
    %cst_66 = arith.constant dense<0.000000e+00> : vector<1xf32>
    %240 = vector.multi_reduction <add>, %239, %cst_66 [1] : vector<1x128xf32> to vector<1xf32>
    %241 = vector.shape_cast %240 : vector<1xf32> to vector<1x1xf32>
    %242 = arith.cmpf oge, %241, %180 : vector<1x1xf32>
    %243 = arith.select %242, %233, %231 : vector<1x1xi1>, vector<1x1xi32>
    %c33554432_i32 = arith.constant 33554432 : i32
    %244 = vector.broadcast %c33554432_i32 : i32 to vector<1x1xi32>
    %245 = arith.addi %243, %244 : vector<1x1xi32>
    %246 = vector.broadcast %245 : vector<1x1xi32> to vector<2x128xi32>
    %247 = arith.cmpi sge, %182, %246 : vector<2x128xi32>
    %248 = arith.extui %247 : vector<2x128xi1> to vector<2x128xi32>
    %249 = arith.sitofp %248 : vector<2x128xi32> to vector<2x128xf32>
    %cst_67 = arith.constant dense<0.000000e+00> : vector<128xf32>
    %250 = vector.multi_reduction <add>, %249, %cst_67 [0] : vector<2x128xf32> to vector<128xf32>
    %251 = vector.shape_cast %250 : vector<128xf32> to vector<1x128xf32>
    %cst_68 = arith.constant dense<0.000000e+00> : vector<1xf32>
    %252 = vector.multi_reduction <add>, %251, %cst_68 [1] : vector<1x128xf32> to vector<1xf32>
    %253 = vector.shape_cast %252 : vector<1xf32> to vector<1x1xf32>
    %254 = arith.cmpf oge, %253, %180 : vector<1x1xf32>
    %255 = arith.select %254, %245, %243 : vector<1x1xi1>, vector<1x1xi32>
    %c16777216_i32 = arith.constant 16777216 : i32
    %256 = vector.broadcast %c16777216_i32 : i32 to vector<1x1xi32>
    %257 = arith.addi %255, %256 : vector<1x1xi32>
    %258 = vector.broadcast %257 : vector<1x1xi32> to vector<2x128xi32>
    %259 = arith.cmpi sge, %182, %258 : vector<2x128xi32>
    %260 = arith.extui %259 : vector<2x128xi1> to vector<2x128xi32>
    %261 = arith.sitofp %260 : vector<2x128xi32> to vector<2x128xf32>
    %cst_69 = arith.constant dense<0.000000e+00> : vector<128xf32>
    %262 = vector.multi_reduction <add>, %261, %cst_69 [0] : vector<2x128xf32> to vector<128xf32>
    %263 = vector.shape_cast %262 : vector<128xf32> to vector<1x128xf32>
    %cst_70 = arith.constant dense<0.000000e+00> : vector<1xf32>
    %264 = vector.multi_reduction <add>, %263, %cst_70 [1] : vector<1x128xf32> to vector<1xf32>
    %265 = vector.shape_cast %264 : vector<1xf32> to vector<1x1xf32>
    %266 = arith.cmpf oge, %265, %180 : vector<1x1xf32>
    %267 = arith.select %266, %257, %255 : vector<1x1xi1>, vector<1x1xi32>
    %c8388608_i32 = arith.constant 8388608 : i32
    %268 = vector.broadcast %c8388608_i32 : i32 to vector<1x1xi32>
    %269 = arith.addi %267, %268 : vector<1x1xi32>
    %270 = vector.broadcast %269 : vector<1x1xi32> to vector<2x128xi32>
    %271 = arith.cmpi sge, %182, %270 : vector<2x128xi32>
    %272 = arith.extui %271 : vector<2x128xi1> to vector<2x128xi32>
    %273 = arith.sitofp %272 : vector<2x128xi32> to vector<2x128xf32>
    %cst_71 = arith.constant dense<0.000000e+00> : vector<128xf32>
    %274 = vector.multi_reduction <add>, %273, %cst_71 [0] : vector<2x128xf32> to vector<128xf32>
    %275 = vector.shape_cast %274 : vector<128xf32> to vector<1x128xf32>
    %cst_72 = arith.constant dense<0.000000e+00> : vector<1xf32>
    %276 = vector.multi_reduction <add>, %275, %cst_72 [1] : vector<1x128xf32> to vector<1xf32>
    %277 = vector.shape_cast %276 : vector<1xf32> to vector<1x1xf32>
    %278 = arith.cmpf oge, %277, %180 : vector<1x1xf32>
    %279 = arith.select %278, %269, %267 : vector<1x1xi1>, vector<1x1xi32>
    %c4194304_i32 = arith.constant 4194304 : i32
    %280 = vector.broadcast %c4194304_i32 : i32 to vector<1x1xi32>
    %281 = arith.addi %279, %280 : vector<1x1xi32>
    %282 = vector.broadcast %281 : vector<1x1xi32> to vector<2x128xi32>
    %283 = arith.cmpi sge, %182, %282 : vector<2x128xi32>
    %284 = arith.extui %283 : vector<2x128xi1> to vector<2x128xi32>
    %285 = arith.sitofp %284 : vector<2x128xi32> to vector<2x128xf32>
    %cst_73 = arith.constant dense<0.000000e+00> : vector<128xf32>
    %286 = vector.multi_reduction <add>, %285, %cst_73 [0] : vector<2x128xf32> to vector<128xf32>
    %287 = vector.shape_cast %286 : vector<128xf32> to vector<1x128xf32>
    %cst_74 = arith.constant dense<0.000000e+00> : vector<1xf32>
    %288 = vector.multi_reduction <add>, %287, %cst_74 [1] : vector<1x128xf32> to vector<1xf32>
    %289 = vector.shape_cast %288 : vector<1xf32> to vector<1x1xf32>
    %290 = arith.cmpf oge, %289, %180 : vector<1x1xf32>
    %291 = arith.select %290, %281, %279 : vector<1x1xi1>, vector<1x1xi32>
    %c2097152_i32 = arith.constant 2097152 : i32
    %292 = vector.broadcast %c2097152_i32 : i32 to vector<1x1xi32>
    %293 = arith.addi %291, %292 : vector<1x1xi32>
    %294 = vector.broadcast %293 : vector<1x1xi32> to vector<2x128xi32>
    %295 = arith.cmpi sge, %182, %294 : vector<2x128xi32>
    %296 = arith.extui %295 : vector<2x128xi1> to vector<2x128xi32>
    %297 = arith.sitofp %296 : vector<2x128xi32> to vector<2x128xf32>
    %cst_75 = arith.constant dense<0.000000e+00> : vector<128xf32>
    %298 = vector.multi_reduction <add>, %297, %cst_75 [0] : vector<2x128xf32> to vector<128xf32>
    %299 = vector.shape_cast %298 : vector<128xf32> to vector<1x128xf32>
    %cst_76 = arith.constant dense<0.000000e+00> : vector<1xf32>
    %300 = vector.multi_reduction <add>, %299, %cst_76 [1] : vector<1x128xf32> to vector<1xf32>
    %301 = vector.shape_cast %300 : vector<1xf32> to vector<1x1xf32>
    %302 = arith.cmpf oge, %301, %180 : vector<1x1xf32>
    %303 = arith.select %302, %293, %291 : vector<1x1xi1>, vector<1x1xi32>
    %c1048576_i32 = arith.constant 1048576 : i32
    %304 = vector.broadcast %c1048576_i32 : i32 to vector<1x1xi32>
    %305 = arith.addi %303, %304 : vector<1x1xi32>
    %306 = vector.broadcast %305 : vector<1x1xi32> to vector<2x128xi32>
    %307 = arith.cmpi sge, %182, %306 : vector<2x128xi32>
    %308 = arith.extui %307 : vector<2x128xi1> to vector<2x128xi32>
    %309 = arith.sitofp %308 : vector<2x128xi32> to vector<2x128xf32>
    %cst_77 = arith.constant dense<0.000000e+00> : vector<128xf32>
    %310 = vector.multi_reduction <add>, %309, %cst_77 [0] : vector<2x128xf32> to vector<128xf32>
    %311 = vector.shape_cast %310 : vector<128xf32> to vector<1x128xf32>
    %cst_78 = arith.constant dense<0.000000e+00> : vector<1xf32>
    %312 = vector.multi_reduction <add>, %311, %cst_78 [1] : vector<1x128xf32> to vector<1xf32>
    %313 = vector.shape_cast %312 : vector<1xf32> to vector<1x1xf32>
    %314 = arith.cmpf oge, %313, %180 : vector<1x1xf32>
    %315 = arith.select %314, %305, %303 : vector<1x1xi1>, vector<1x1xi32>
    %c524288_i32 = arith.constant 524288 : i32
    %316 = vector.broadcast %c524288_i32 : i32 to vector<1x1xi32>
    %317 = arith.addi %315, %316 : vector<1x1xi32>
    %318 = vector.broadcast %317 : vector<1x1xi32> to vector<2x128xi32>
    %319 = arith.cmpi sge, %182, %318 : vector<2x128xi32>
    %320 = arith.extui %319 : vector<2x128xi1> to vector<2x128xi32>
    %321 = arith.sitofp %320 : vector<2x128xi32> to vector<2x128xf32>
    %cst_79 = arith.constant dense<0.000000e+00> : vector<128xf32>
    %322 = vector.multi_reduction <add>, %321, %cst_79 [0] : vector<2x128xf32> to vector<128xf32>
    %323 = vector.shape_cast %322 : vector<128xf32> to vector<1x128xf32>
    %cst_80 = arith.constant dense<0.000000e+00> : vector<1xf32>
    %324 = vector.multi_reduction <add>, %323, %cst_80 [1] : vector<1x128xf32> to vector<1xf32>
    %325 = vector.shape_cast %324 : vector<1xf32> to vector<1x1xf32>
    %326 = arith.cmpf oge, %325, %180 : vector<1x1xf32>
    %327 = arith.select %326, %317, %315 : vector<1x1xi1>, vector<1x1xi32>
    %c262144_i32 = arith.constant 262144 : i32
    %328 = vector.broadcast %c262144_i32 : i32 to vector<1x1xi32>
    %329 = arith.addi %327, %328 : vector<1x1xi32>
    %330 = vector.broadcast %329 : vector<1x1xi32> to vector<2x128xi32>
    %331 = arith.cmpi sge, %182, %330 : vector<2x128xi32>
    %332 = arith.extui %331 : vector<2x128xi1> to vector<2x128xi32>
    %333 = arith.sitofp %332 : vector<2x128xi32> to vector<2x128xf32>
    %cst_81 = arith.constant dense<0.000000e+00> : vector<128xf32>
    %334 = vector.multi_reduction <add>, %333, %cst_81 [0] : vector<2x128xf32> to vector<128xf32>
    %335 = vector.shape_cast %334 : vector<128xf32> to vector<1x128xf32>
    %cst_82 = arith.constant dense<0.000000e+00> : vector<1xf32>
    %336 = vector.multi_reduction <add>, %335, %cst_82 [1] : vector<1x128xf32> to vector<1xf32>
    %337 = vector.shape_cast %336 : vector<1xf32> to vector<1x1xf32>
    %338 = arith.cmpf oge, %337, %180 : vector<1x1xf32>
    %339 = arith.select %338, %329, %327 : vector<1x1xi1>, vector<1x1xi32>
    %c131072_i32 = arith.constant 131072 : i32
    %340 = vector.broadcast %c131072_i32 : i32 to vector<1x1xi32>
    %341 = arith.addi %339, %340 : vector<1x1xi32>
    %342 = vector.broadcast %341 : vector<1x1xi32> to vector<2x128xi32>
    %343 = arith.cmpi sge, %182, %342 : vector<2x128xi32>
    %344 = arith.extui %343 : vector<2x128xi1> to vector<2x128xi32>
    %345 = arith.sitofp %344 : vector<2x128xi32> to vector<2x128xf32>
    %cst_83 = arith.constant dense<0.000000e+00> : vector<128xf32>
    %346 = vector.multi_reduction <add>, %345, %cst_83 [0] : vector<2x128xf32> to vector<128xf32>
    %347 = vector.shape_cast %346 : vector<128xf32> to vector<1x128xf32>
    %cst_84 = arith.constant dense<0.000000e+00> : vector<1xf32>
    %348 = vector.multi_reduction <add>, %347, %cst_84 [1] : vector<1x128xf32> to vector<1xf32>
    %349 = vector.shape_cast %348 : vector<1xf32> to vector<1x1xf32>
    %350 = arith.cmpf oge, %349, %180 : vector<1x1xf32>
    %351 = arith.select %350, %341, %339 : vector<1x1xi1>, vector<1x1xi32>
    %c65536_i32 = arith.constant 65536 : i32
    %352 = vector.broadcast %c65536_i32 : i32 to vector<1x1xi32>
    %353 = arith.addi %351, %352 : vector<1x1xi32>
    %354 = vector.broadcast %353 : vector<1x1xi32> to vector<2x128xi32>
    %355 = arith.cmpi sge, %182, %354 : vector<2x128xi32>
    %356 = arith.extui %355 : vector<2x128xi1> to vector<2x128xi32>
    %357 = arith.sitofp %356 : vector<2x128xi32> to vector<2x128xf32>
    %cst_85 = arith.constant dense<0.000000e+00> : vector<128xf32>
    %358 = vector.multi_reduction <add>, %357, %cst_85 [0] : vector<2x128xf32> to vector<128xf32>
    %359 = vector.shape_cast %358 : vector<128xf32> to vector<1x128xf32>
    %cst_86 = arith.constant dense<0.000000e+00> : vector<1xf32>
    %360 = vector.multi_reduction <add>, %359, %cst_86 [1] : vector<1x128xf32> to vector<1xf32>
    %361 = vector.shape_cast %360 : vector<1xf32> to vector<1x1xf32>
    %362 = arith.cmpf oge, %361, %180 : vector<1x1xf32>
    %363 = arith.select %362, %353, %351 : vector<1x1xi1>, vector<1x1xi32>
    %c32768_i32 = arith.constant 32768 : i32
    %364 = vector.broadcast %c32768_i32 : i32 to vector<1x1xi32>
    %365 = arith.addi %363, %364 : vector<1x1xi32>
    %366 = vector.broadcast %365 : vector<1x1xi32> to vector<2x128xi32>
    %367 = arith.cmpi sge, %182, %366 : vector<2x128xi32>
    %368 = arith.extui %367 : vector<2x128xi1> to vector<2x128xi32>
    %369 = arith.sitofp %368 : vector<2x128xi32> to vector<2x128xf32>
    %cst_87 = arith.constant dense<0.000000e+00> : vector<128xf32>
    %370 = vector.multi_reduction <add>, %369, %cst_87 [0] : vector<2x128xf32> to vector<128xf32>
    %371 = vector.shape_cast %370 : vector<128xf32> to vector<1x128xf32>
    %cst_88 = arith.constant dense<0.000000e+00> : vector<1xf32>
    %372 = vector.multi_reduction <add>, %371, %cst_88 [1] : vector<1x128xf32> to vector<1xf32>
    %373 = vector.shape_cast %372 : vector<1xf32> to vector<1x1xf32>
    %374 = arith.cmpf oge, %373, %180 : vector<1x1xf32>
    %375 = arith.select %374, %365, %363 : vector<1x1xi1>, vector<1x1xi32>
    %c16384_i32 = arith.constant 16384 : i32
    %376 = vector.broadcast %c16384_i32 : i32 to vector<1x1xi32>
    %377 = arith.addi %375, %376 : vector<1x1xi32>
    %378 = vector.broadcast %377 : vector<1x1xi32> to vector<2x128xi32>
    %379 = arith.cmpi sge, %182, %378 : vector<2x128xi32>
    %380 = arith.extui %379 : vector<2x128xi1> to vector<2x128xi32>
    %381 = arith.sitofp %380 : vector<2x128xi32> to vector<2x128xf32>
    %cst_89 = arith.constant dense<0.000000e+00> : vector<128xf32>
    %382 = vector.multi_reduction <add>, %381, %cst_89 [0] : vector<2x128xf32> to vector<128xf32>
    %383 = vector.shape_cast %382 : vector<128xf32> to vector<1x128xf32>
    %cst_90 = arith.constant dense<0.000000e+00> : vector<1xf32>
    %384 = vector.multi_reduction <add>, %383, %cst_90 [1] : vector<1x128xf32> to vector<1xf32>
    %385 = vector.shape_cast %384 : vector<1xf32> to vector<1x1xf32>
    %386 = arith.cmpf oge, %385, %180 : vector<1x1xf32>
    %387 = arith.select %386, %377, %375 : vector<1x1xi1>, vector<1x1xi32>
    %c8192_i32 = arith.constant 8192 : i32
    %388 = vector.broadcast %c8192_i32 : i32 to vector<1x1xi32>
    %389 = arith.addi %387, %388 : vector<1x1xi32>
    %390 = vector.broadcast %389 : vector<1x1xi32> to vector<2x128xi32>
    %391 = arith.cmpi sge, %182, %390 : vector<2x128xi32>
    %392 = arith.extui %391 : vector<2x128xi1> to vector<2x128xi32>
    %393 = arith.sitofp %392 : vector<2x128xi32> to vector<2x128xf32>
    %cst_91 = arith.constant dense<0.000000e+00> : vector<128xf32>
    %394 = vector.multi_reduction <add>, %393, %cst_91 [0] : vector<2x128xf32> to vector<128xf32>
    %395 = vector.shape_cast %394 : vector<128xf32> to vector<1x128xf32>
    %cst_92 = arith.constant dense<0.000000e+00> : vector<1xf32>
    %396 = vector.multi_reduction <add>, %395, %cst_92 [1] : vector<1x128xf32> to vector<1xf32>
    %397 = vector.shape_cast %396 : vector<1xf32> to vector<1x1xf32>
    %398 = arith.cmpf oge, %397, %180 : vector<1x1xf32>
    %399 = arith.select %398, %389, %387 : vector<1x1xi1>, vector<1x1xi32>
    %c4096_i32 = arith.constant 4096 : i32
    %400 = vector.broadcast %c4096_i32 : i32 to vector<1x1xi32>
    %401 = arith.addi %399, %400 : vector<1x1xi32>
    %402 = vector.broadcast %401 : vector<1x1xi32> to vector<2x128xi32>
    %403 = arith.cmpi sge, %182, %402 : vector<2x128xi32>
    %404 = arith.extui %403 : vector<2x128xi1> to vector<2x128xi32>
    %405 = arith.sitofp %404 : vector<2x128xi32> to vector<2x128xf32>
    %cst_93 = arith.constant dense<0.000000e+00> : vector<128xf32>
    %406 = vector.multi_reduction <add>, %405, %cst_93 [0] : vector<2x128xf32> to vector<128xf32>
    %407 = vector.shape_cast %406 : vector<128xf32> to vector<1x128xf32>
    %cst_94 = arith.constant dense<0.000000e+00> : vector<1xf32>
    %408 = vector.multi_reduction <add>, %407, %cst_94 [1] : vector<1x128xf32> to vector<1xf32>
    %409 = vector.shape_cast %408 : vector<1xf32> to vector<1x1xf32>
    %410 = arith.cmpf oge, %409, %180 : vector<1x1xf32>
    %411 = arith.select %410, %401, %399 : vector<1x1xi1>, vector<1x1xi32>
    %c2048_i32 = arith.constant 2048 : i32
    %412 = vector.broadcast %c2048_i32 : i32 to vector<1x1xi32>
    %413 = arith.addi %411, %412 : vector<1x1xi32>
    %414 = vector.broadcast %413 : vector<1x1xi32> to vector<2x128xi32>
    %415 = arith.cmpi sge, %182, %414 : vector<2x128xi32>
    %416 = arith.extui %415 : vector<2x128xi1> to vector<2x128xi32>
    %417 = arith.sitofp %416 : vector<2x128xi32> to vector<2x128xf32>
    %cst_95 = arith.constant dense<0.000000e+00> : vector<128xf32>
    %418 = vector.multi_reduction <add>, %417, %cst_95 [0] : vector<2x128xf32> to vector<128xf32>
    %419 = vector.shape_cast %418 : vector<128xf32> to vector<1x128xf32>
    %cst_96 = arith.constant dense<0.000000e+00> : vector<1xf32>
    %420 = vector.multi_reduction <add>, %419, %cst_96 [1] : vector<1x128xf32> to vector<1xf32>
    %421 = vector.shape_cast %420 : vector<1xf32> to vector<1x1xf32>
    %422 = arith.cmpf oge, %421, %180 : vector<1x1xf32>
    %423 = arith.select %422, %413, %411 : vector<1x1xi1>, vector<1x1xi32>
    %c1024_i32 = arith.constant 1024 : i32
    %424 = vector.broadcast %c1024_i32 : i32 to vector<1x1xi32>
    %425 = arith.addi %423, %424 : vector<1x1xi32>
    %426 = vector.broadcast %425 : vector<1x1xi32> to vector<2x128xi32>
    %427 = arith.cmpi sge, %182, %426 : vector<2x128xi32>
    %428 = arith.extui %427 : vector<2x128xi1> to vector<2x128xi32>
    %429 = arith.sitofp %428 : vector<2x128xi32> to vector<2x128xf32>
    %cst_97 = arith.constant dense<0.000000e+00> : vector<128xf32>
    %430 = vector.multi_reduction <add>, %429, %cst_97 [0] : vector<2x128xf32> to vector<128xf32>
    %431 = vector.shape_cast %430 : vector<128xf32> to vector<1x128xf32>
    %cst_98 = arith.constant dense<0.000000e+00> : vector<1xf32>
    %432 = vector.multi_reduction <add>, %431, %cst_98 [1] : vector<1x128xf32> to vector<1xf32>
    %433 = vector.shape_cast %432 : vector<1xf32> to vector<1x1xf32>
    %434 = arith.cmpf oge, %433, %180 : vector<1x1xf32>
    %435 = arith.select %434, %425, %423 : vector<1x1xi1>, vector<1x1xi32>
    %c512_i32 = arith.constant 512 : i32
    %436 = vector.broadcast %c512_i32 : i32 to vector<1x1xi32>
    %437 = arith.addi %435, %436 : vector<1x1xi32>
    %438 = vector.broadcast %437 : vector<1x1xi32> to vector<2x128xi32>
    %439 = arith.cmpi sge, %182, %438 : vector<2x128xi32>
    %440 = arith.extui %439 : vector<2x128xi1> to vector<2x128xi32>
    %441 = arith.sitofp %440 : vector<2x128xi32> to vector<2x128xf32>
    %cst_99 = arith.constant dense<0.000000e+00> : vector<128xf32>
    %442 = vector.multi_reduction <add>, %441, %cst_99 [0] : vector<2x128xf32> to vector<128xf32>
    %443 = vector.shape_cast %442 : vector<128xf32> to vector<1x128xf32>
    %cst_100 = arith.constant dense<0.000000e+00> : vector<1xf32>
    %444 = vector.multi_reduction <add>, %443, %cst_100 [1] : vector<1x128xf32> to vector<1xf32>
    %445 = vector.shape_cast %444 : vector<1xf32> to vector<1x1xf32>
    %446 = arith.cmpf oge, %445, %180 : vector<1x1xf32>
    %447 = arith.select %446, %437, %435 : vector<1x1xi1>, vector<1x1xi32>
    %c256_i32_101 = arith.constant 256 : i32
    %448 = vector.broadcast %c256_i32_101 : i32 to vector<1x1xi32>
    %449 = arith.addi %447, %448 : vector<1x1xi32>
    %450 = vector.broadcast %449 : vector<1x1xi32> to vector<2x128xi32>
    %451 = arith.cmpi sge, %182, %450 : vector<2x128xi32>
    %452 = arith.extui %451 : vector<2x128xi1> to vector<2x128xi32>
    %453 = arith.sitofp %452 : vector<2x128xi32> to vector<2x128xf32>
    %cst_102 = arith.constant dense<0.000000e+00> : vector<128xf32>
    %454 = vector.multi_reduction <add>, %453, %cst_102 [0] : vector<2x128xf32> to vector<128xf32>
    %455 = vector.shape_cast %454 : vector<128xf32> to vector<1x128xf32>
    %cst_103 = arith.constant dense<0.000000e+00> : vector<1xf32>
    %456 = vector.multi_reduction <add>, %455, %cst_103 [1] : vector<1x128xf32> to vector<1xf32>
    %457 = vector.shape_cast %456 : vector<1xf32> to vector<1x1xf32>
    %458 = arith.cmpf oge, %457, %180 : vector<1x1xf32>
    %459 = arith.select %458, %449, %447 : vector<1x1xi1>, vector<1x1xi32>
    %c128_i32 = arith.constant 128 : i32
    %460 = vector.broadcast %c128_i32 : i32 to vector<1x1xi32>
    %461 = arith.addi %459, %460 : vector<1x1xi32>
    %462 = vector.broadcast %461 : vector<1x1xi32> to vector<2x128xi32>
    %463 = arith.cmpi sge, %182, %462 : vector<2x128xi32>
    %464 = arith.extui %463 : vector<2x128xi1> to vector<2x128xi32>
    %465 = arith.sitofp %464 : vector<2x128xi32> to vector<2x128xf32>
    %cst_104 = arith.constant dense<0.000000e+00> : vector<128xf32>
    %466 = vector.multi_reduction <add>, %465, %cst_104 [0] : vector<2x128xf32> to vector<128xf32>
    %467 = vector.shape_cast %466 : vector<128xf32> to vector<1x128xf32>
    %cst_105 = arith.constant dense<0.000000e+00> : vector<1xf32>
    %468 = vector.multi_reduction <add>, %467, %cst_105 [1] : vector<1x128xf32> to vector<1xf32>
    %469 = vector.shape_cast %468 : vector<1xf32> to vector<1x1xf32>
    %470 = arith.cmpf oge, %469, %180 : vector<1x1xf32>
    %471 = arith.select %470, %461, %459 : vector<1x1xi1>, vector<1x1xi32>
    %c64_i32 = arith.constant 64 : i32
    %472 = vector.broadcast %c64_i32 : i32 to vector<1x1xi32>
    %473 = arith.addi %471, %472 : vector<1x1xi32>
    %474 = vector.broadcast %473 : vector<1x1xi32> to vector<2x128xi32>
    %475 = arith.cmpi sge, %182, %474 : vector<2x128xi32>
    %476 = arith.extui %475 : vector<2x128xi1> to vector<2x128xi32>
    %477 = arith.sitofp %476 : vector<2x128xi32> to vector<2x128xf32>
    %cst_106 = arith.constant dense<0.000000e+00> : vector<128xf32>
    %478 = vector.multi_reduction <add>, %477, %cst_106 [0] : vector<2x128xf32> to vector<128xf32>
    %479 = vector.shape_cast %478 : vector<128xf32> to vector<1x128xf32>
    %cst_107 = arith.constant dense<0.000000e+00> : vector<1xf32>
    %480 = vector.multi_reduction <add>, %479, %cst_107 [1] : vector<1x128xf32> to vector<1xf32>
    %481 = vector.shape_cast %480 : vector<1xf32> to vector<1x1xf32>
    %482 = arith.cmpf oge, %481, %180 : vector<1x1xf32>
    %483 = arith.select %482, %473, %471 : vector<1x1xi1>, vector<1x1xi32>
    %c32_i32 = arith.constant 32 : i32
    %484 = vector.broadcast %c32_i32 : i32 to vector<1x1xi32>
    %485 = arith.addi %483, %484 : vector<1x1xi32>
    %486 = vector.broadcast %485 : vector<1x1xi32> to vector<2x128xi32>
    %487 = arith.cmpi sge, %182, %486 : vector<2x128xi32>
    %488 = arith.extui %487 : vector<2x128xi1> to vector<2x128xi32>
    %489 = arith.sitofp %488 : vector<2x128xi32> to vector<2x128xf32>
    %cst_108 = arith.constant dense<0.000000e+00> : vector<128xf32>
    %490 = vector.multi_reduction <add>, %489, %cst_108 [0] : vector<2x128xf32> to vector<128xf32>
    %491 = vector.shape_cast %490 : vector<128xf32> to vector<1x128xf32>
    %cst_109 = arith.constant dense<0.000000e+00> : vector<1xf32>
    %492 = vector.multi_reduction <add>, %491, %cst_109 [1] : vector<1x128xf32> to vector<1xf32>
    %493 = vector.shape_cast %492 : vector<1xf32> to vector<1x1xf32>
    %494 = arith.cmpf oge, %493, %180 : vector<1x1xf32>
    %495 = arith.select %494, %485, %483 : vector<1x1xi1>, vector<1x1xi32>
    %c16_i32 = arith.constant 16 : i32
    %496 = vector.broadcast %c16_i32 : i32 to vector<1x1xi32>
    %497 = arith.addi %495, %496 : vector<1x1xi32>
    %498 = vector.broadcast %497 : vector<1x1xi32> to vector<2x128xi32>
    %499 = arith.cmpi sge, %182, %498 : vector<2x128xi32>
    %500 = arith.extui %499 : vector<2x128xi1> to vector<2x128xi32>
    %501 = arith.sitofp %500 : vector<2x128xi32> to vector<2x128xf32>
    %cst_110 = arith.constant dense<0.000000e+00> : vector<128xf32>
    %502 = vector.multi_reduction <add>, %501, %cst_110 [0] : vector<2x128xf32> to vector<128xf32>
    %503 = vector.shape_cast %502 : vector<128xf32> to vector<1x128xf32>
    %cst_111 = arith.constant dense<0.000000e+00> : vector<1xf32>
    %504 = vector.multi_reduction <add>, %503, %cst_111 [1] : vector<1x128xf32> to vector<1xf32>
    %505 = vector.shape_cast %504 : vector<1xf32> to vector<1x1xf32>
    %506 = arith.cmpf oge, %505, %180 : vector<1x1xf32>
    %507 = arith.select %506, %497, %495 : vector<1x1xi1>, vector<1x1xi32>
    %c8_i32 = arith.constant 8 : i32
    %508 = vector.broadcast %c8_i32 : i32 to vector<1x1xi32>
    %509 = arith.addi %507, %508 : vector<1x1xi32>
    %510 = vector.broadcast %509 : vector<1x1xi32> to vector<2x128xi32>
    %511 = arith.cmpi sge, %182, %510 : vector<2x128xi32>
    %512 = arith.extui %511 : vector<2x128xi1> to vector<2x128xi32>
    %513 = arith.sitofp %512 : vector<2x128xi32> to vector<2x128xf32>
    %cst_112 = arith.constant dense<0.000000e+00> : vector<128xf32>
    %514 = vector.multi_reduction <add>, %513, %cst_112 [0] : vector<2x128xf32> to vector<128xf32>
    %515 = vector.shape_cast %514 : vector<128xf32> to vector<1x128xf32>
    %cst_113 = arith.constant dense<0.000000e+00> : vector<1xf32>
    %516 = vector.multi_reduction <add>, %515, %cst_113 [1] : vector<1x128xf32> to vector<1xf32>
    %517 = vector.shape_cast %516 : vector<1xf32> to vector<1x1xf32>
    %518 = arith.cmpf oge, %517, %180 : vector<1x1xf32>
    %519 = arith.select %518, %509, %507 : vector<1x1xi1>, vector<1x1xi32>
    %c4_i32_114 = arith.constant 4 : i32
    %520 = vector.broadcast %c4_i32_114 : i32 to vector<1x1xi32>
    %521 = arith.addi %519, %520 : vector<1x1xi32>
    %522 = vector.broadcast %521 : vector<1x1xi32> to vector<2x128xi32>
    %523 = arith.cmpi sge, %182, %522 : vector<2x128xi32>
    %524 = arith.extui %523 : vector<2x128xi1> to vector<2x128xi32>
    %525 = arith.sitofp %524 : vector<2x128xi32> to vector<2x128xf32>
    %cst_115 = arith.constant dense<0.000000e+00> : vector<128xf32>
    %526 = vector.multi_reduction <add>, %525, %cst_115 [0] : vector<2x128xf32> to vector<128xf32>
    %527 = vector.shape_cast %526 : vector<128xf32> to vector<1x128xf32>
    %cst_116 = arith.constant dense<0.000000e+00> : vector<1xf32>
    %528 = vector.multi_reduction <add>, %527, %cst_116 [1] : vector<1x128xf32> to vector<1xf32>
    %529 = vector.shape_cast %528 : vector<1xf32> to vector<1x1xf32>
    %530 = arith.cmpf oge, %529, %180 : vector<1x1xf32>
    %531 = arith.select %530, %521, %519 : vector<1x1xi1>, vector<1x1xi32>
    %c2_i32 = arith.constant 2 : i32
    %532 = vector.broadcast %c2_i32 : i32 to vector<1x1xi32>
    %533 = arith.addi %531, %532 : vector<1x1xi32>
    %534 = vector.broadcast %533 : vector<1x1xi32> to vector<2x128xi32>
    %535 = arith.cmpi sge, %182, %534 : vector<2x128xi32>
    %536 = arith.extui %535 : vector<2x128xi1> to vector<2x128xi32>
    %537 = arith.sitofp %536 : vector<2x128xi32> to vector<2x128xf32>
    %cst_117 = arith.constant dense<0.000000e+00> : vector<128xf32>
    %538 = vector.multi_reduction <add>, %537, %cst_117 [0] : vector<2x128xf32> to vector<128xf32>
    %539 = vector.shape_cast %538 : vector<128xf32> to vector<1x128xf32>
    %cst_118 = arith.constant dense<0.000000e+00> : vector<1xf32>
    %540 = vector.multi_reduction <add>, %539, %cst_118 [1] : vector<1x128xf32> to vector<1xf32>
    %541 = vector.shape_cast %540 : vector<1xf32> to vector<1x1xf32>
    %542 = arith.cmpf oge, %541, %180 : vector<1x1xf32>
    %543 = arith.select %542, %533, %531 : vector<1x1xi1>, vector<1x1xi32>
    %c1_i32 = arith.constant 1 : i32
    %544 = vector.broadcast %c1_i32 : i32 to vector<1x1xi32>
    %545 = arith.addi %543, %544 : vector<1x1xi32>
    %546 = vector.broadcast %545 : vector<1x1xi32> to vector<2x128xi32>
    %547 = arith.cmpi sge, %182, %546 : vector<2x128xi32>
    %548 = arith.extui %547 : vector<2x128xi1> to vector<2x128xi32>
    %549 = arith.sitofp %548 : vector<2x128xi32> to vector<2x128xf32>
    %cst_119 = arith.constant dense<0.000000e+00> : vector<128xf32>
    %550 = vector.multi_reduction <add>, %549, %cst_119 [0] : vector<2x128xf32> to vector<128xf32>
    %551 = vector.shape_cast %550 : vector<128xf32> to vector<1x128xf32>
    %cst_120 = arith.constant dense<0.000000e+00> : vector<1xf32>
    %552 = vector.multi_reduction <add>, %551, %cst_120 [1] : vector<1x128xf32> to vector<1xf32>
    %553 = vector.shape_cast %552 : vector<1xf32> to vector<1x1xf32>
    %554 = arith.cmpf oge, %553, %180 : vector<1x1xf32>
    %555 = arith.select %554, %545, %543 : vector<1x1xi1>, vector<1x1xi32>
    %556 = tpu.bitcast %555 : vector<1x1xi32> -> vector<1x1xf32>
    %557 = vector.broadcast %556 : vector<1x1xf32> to vector<2x128xf32>
    %558 = arith.cmpf ogt, %181, %557 : vector<2x128xf32>
    %cst_121 = arith.constant 0.000000e+00 : f32
    %559 = vector.broadcast %cst_121 : f32 to vector<2x128xf32>
    %560 = arith.select %558, %181, %559 : vector<2x128xi1>, vector<2x128xf32>
    %cst_122 = arith.constant dense<0.000000e+00> : vector<128xf32>
    %561 = vector.multi_reduction <add>, %560, %cst_122 [0] : vector<2x128xf32> to vector<128xf32>
    %562 = vector.shape_cast %561 : vector<128xf32> to vector<1x128xf32>
    %cst_123 = arith.constant dense<0.000000e+00> : vector<1xf32>
    %563 = vector.multi_reduction <add>, %562, %cst_123 [1] : vector<1x128xf32> to vector<1xf32>
    %564 = vector.shape_cast %563 : vector<1xf32> to vector<1x1xf32>
    %565 = arith.extui %558 : vector<2x128xi1> to vector<2x128xi32>
    %566 = arith.sitofp %565 : vector<2x128xi32> to vector<2x128xf32>
    %cst_124 = arith.constant dense<0.000000e+00> : vector<128xf32>
    %567 = vector.multi_reduction <add>, %566, %cst_124 [0] : vector<2x128xf32> to vector<128xf32>
    %568 = vector.shape_cast %567 : vector<128xf32> to vector<1x128xf32>
    %cst_125 = arith.constant dense<0.000000e+00> : vector<1xf32>
    %569 = vector.multi_reduction <add>, %568, %cst_125 [1] : vector<1x128xf32> to vector<1xf32>
    %570 = vector.shape_cast %569 : vector<1xf32> to vector<1x1xf32>
    %571 = arith.cmpf olt, %570, %180 : vector<1x1xf32>
    %572 = arith.subf %180, %570 : vector<1x1xf32>
    %573 = arith.mulf %572, %556 : vector<1x1xf32>
    %cst_126 = arith.constant 0.000000e+00 : f32
    %574 = vector.broadcast %cst_126 : f32 to vector<1x1xf32>
    %575 = arith.select %571, %573, %574 : vector<1x1xi1>, vector<1x1xf32>
    %cst_127 = arith.constant 0.000000e+00 : f32
    %576 = vector.broadcast %cst_127 : f32 to vector<1x1xf32>
    %577 = arith.cmpf ogt, %180, %576 : vector<1x1xf32>
    %578 = arith.addf %564, %575 : vector<1x1xf32>
    %cst_128 = arith.constant 0.000000e+00 : f32
    %579 = vector.broadcast %cst_128 : f32 to vector<1x1xf32>
    %580 = arith.select %577, %578, %579 : vector<1x1xi1>, vector<1x1xf32>
    %581 = tpu.iota {dimensions = array<i32: 1>} : vector<1x128xi32>
    %c0_i32_129 = arith.constant 0 : i32
    %582 = vector.broadcast %c0_i32_129 : i32 to vector<1x128xi32>
    %583 = arith.cmpi eq, %581, %582 : vector<1x128xi32>
    %cst_130 = arith.constant 0.000000e+00 : f32
    %584 = vector.shape_cast %165 : vector<1x1xf32> to vector<1x1xf32>
    %585 = vector.broadcast %584 : vector<1x1xf32> to vector<1x128xf32>
    %586 = vector.broadcast %cst_130 : f32 to vector<1x128xf32>
    %587 = arith.select %583, %585, %586 : vector<1x128xi1>, vector<1x128xf32>
    %c1_i32_131 = arith.constant 1 : i32
    %588 = vector.broadcast %c1_i32_131 : i32 to vector<1x128xi32>
    %589 = arith.cmpi eq, %581, %588 : vector<1x128xi32>
    %cst_132 = arith.constant 0.000000e+00 : f32
    %590 = vector.shape_cast %169 : vector<1x1xf32> to vector<1x1xf32>
    %591 = vector.broadcast %590 : vector<1x1xf32> to vector<1x128xf32>
    %592 = vector.broadcast %cst_132 : f32 to vector<1x128xf32>
    %593 = arith.select %589, %591, %592 : vector<1x128xi1>, vector<1x128xf32>
    %594 = arith.addf %587, %593 : vector<1x128xf32>
    %c2_i32_133 = arith.constant 2 : i32
    %595 = vector.broadcast %c2_i32_133 : i32 to vector<1x128xi32>
    %596 = arith.cmpi eq, %581, %595 : vector<1x128xi32>
    %cst_134 = arith.constant 0.000000e+00 : f32
    %597 = vector.shape_cast %580 : vector<1x1xf32> to vector<1x1xf32>
    %598 = vector.broadcast %597 : vector<1x1xf32> to vector<1x128xf32>
    %599 = vector.broadcast %cst_134 : f32 to vector<1x128xf32>
    %600 = arith.select %596, %598, %599 : vector<1x128xi1>, vector<1x128xf32>
    %601 = arith.addf %594, %600 : vector<1x128xf32>
    %c3_i32 = arith.constant 3 : i32
    %602 = vector.broadcast %c3_i32 : i32 to vector<1x128xi32>
    %603 = arith.cmpi eq, %581, %602 : vector<1x128xi32>
    %cst_135 = arith.constant 0.000000e+00 : f32
    %604 = vector.shape_cast %144 : vector<1x1xf32> to vector<1x1xf32>
    %605 = vector.broadcast %604 : vector<1x1xf32> to vector<1x128xf32>
    %606 = vector.broadcast %cst_135 : f32 to vector<1x128xf32>
    %607 = arith.select %603, %605, %606 : vector<1x128xi1>, vector<1x128xf32>
    %608 = arith.addf %601, %607 : vector<1x128xf32>
    %c0_136 = arith.constant 0 : index
    %c0_137 = arith.constant 0 : index
    %c0_138 = arith.constant 0 : index
    %609 = vector.load %arg6[%c0_136, %c0_137, %c0_138] : memref<1x1x128xf32, #tpu.memory_space<vmem>>, vector<1x1x128xf32>
    %610 = vector.shape_cast %609 : vector<1x1x128xf32> to vector<1x128xf32>
    %611 = vector.shape_cast %608 : vector<1x128xf32> to vector<1x1x128xf32>
    tpu.vector_store %arg6[%c0_136, %c0_137, %c0_138], %611 {strides = array<i32>} : memref<1x1x128xf32, #tpu.memory_space<vmem>>, vector<1x1x128xf32>,
    return
  }
  func.func @transform_0(%arg0: i32) -> (i32, i32, i32) {
    %c0_i32 = arith.constant 0 : i32
    %c0_i32_0 = arith.constant 0 : i32
    %c0_i32_1 = arith.constant 0 : i32
    return %arg0, %c0_i32, %c0_i32_0 : i32, i32, i32
  }
  func.func @transform_1(%arg0: i32) -> (i32, i32, i32) {
    %c0_i32 = arith.constant 0 : i32
    %c0_i32_0 = arith.constant 0 : i32
    %c0_i32_1 = arith.constant 0 : i32
    return %arg0, %c0_i32, %c0_i32_0 : i32, i32, i32
  }
  func.func @transform_2(%arg0: i32) -> (i32, i32, i32) {
    %c0_i32 = arith.constant 0 : i32
    %c0_i32_0 = arith.constant 0 : i32
    %c0_i32_1 = arith.constant 0 : i32
    return %arg0, %c0_i32, %c0_i32_0 : i32, i32, i32
  }
  func.func @transform_3(%arg0: i32) -> (i32, i32, i32) {
    %c0_i32 = arith.constant 0 : i32
    %c0_i32_0 = arith.constant 0 : i32
    %c0_i32_1 = arith.constant 0 : i32
    return %arg0, %c0_i32, %c0_i32_0 : i32, i32, i32
  }
  func.func @transform_4(%arg0: i32) -> (i32, i32) {
    %c0_i32 = arith.constant 0 : i32
    %c0_i32_0 = arith.constant 0 : i32
    %c0_i32_1 = arith.constant 0 : i32
    return %c0_i32, %c0_i32_0 : i32, i32
  }
  func.func @transform_5(%arg0: i32) -> (i32, i32, i32) {
    %c0_i32 = arith.constant 0 : i32
    %c0_i32_0 = arith.constant 0 : i32
    %c0_i32_1 = arith.constant 0 : i32
    return %arg0, %c0_i32, %c0_i32_0 : i32, i32, i32
  }
}

</mosaic_0001>

<llo_original>
// kernel: tpu_custom_call.1
$region0: #{tpu_custom_call.1}
  #allocation0 [shape = 'u32[]', space=smem, size = 0x4, offset = 0x4, fixed_abs, tag = 'smem constant byte address 0x4 - core index']
  #allocation1 [shape = 'u32[144,128]{1,0:T(1,128)}', space=vmem, size = 0x12000, scoped, tag = 'internal scratch']
  #allocation2 [shape = 'f32[2,128]{1,0:T(2,128)}', space=vmem, size = 0x400, scoped, tag = 'scratch operand']
  %s0 = inlined_call_operand.vmem [shape: f32[2,16,8], index: 0, kind: input, shape index: {}]
  %s1 = inlined_call_operand.vmem [shape: f32[2,4,4], index: 1, kind: input, shape index: {}]
  %s2 = inlined_call_operand.vmem [shape: f32[2,4,256], index: 2, kind: input, shape index: {}]
  %s3 = inlined_call_operand.vmem [shape: f32[2,8,256], index: 3, kind: input, shape index: {}]
  %s4 = inlined_call_operand.hbm [shape: f32[8,256], index: 4, kind: input, shape index: {}]
  %s5 = inlined_call_operand.hbm [shape: f32[2,1,128], index: 5, kind: output, shape index: {}]
  %s6 = sld [smem:[#allocation0]]
  $region57: #{tpu_custom_call.1} parent=0
    _
  %s8 = ssub.s32 1, %s6
  %s9 = scalar_select 0, %s8, %s6
  $region1: #{tpu_custom_call.1} parent=0
    #allocation3 [shape = 'u8[8192]{0}', space=vmem, size = 0x2000, scoped, tag = 'input window, operand 4, single buffered']
    #allocation4 [shape = 's32[2]{0}', space=sflag, size = 0x8, scoped, tag = 'scoped memory for tpu_custom_call.1']
    #allocation5 [shape = 's32[2]{0}', space=sflag, size = 0x8, scoped, tag = 'scoped memory for tpu_custom_call.1']
    #allocation6 [shape = 'u8[1024]{0}', space=vmem, size = 0x400, scoped, tag = 'output window, operand 0']
    %10 = vsyncpa [#allocation4], 0
    %11 = vsyncpa [#allocation5], 0
    %s12 = scalar_lea.sflag [#allocation5], 1
    %13 = vsyncpa %s12, 0
    loop: start=0, step=1, limit=4
    $region2: #{tpu_custom_call.1} parent=1 // loop_pre_header
      _
    $region3: #{tpu_custom_call.1} parent=1 // loop_header
      %s15 = sphi 0, %s19
      %p16 = scmp.ge.s32.totalorder %s15, 4
      %s25 = sphi 0, %s27
      %s28 = sphi 0, %s25
      %s29 = sphi 0, %s28
      %s45 = sphi 0, %s29
      %s51 = sphi 0, %s53
      %s54 = sphi 0, %s51
      %s55 = sphi 0, %s54
      %s71 = sphi 0, %s55
      %s77 = sphi 0, %s79
      %s80 = sphi 0, %s77
      %s81 = sphi 0, %s80
      %s97 = sphi 0, %s81
      %s103 = sphi 0, %s105
      %s106 = sphi 0, %s103
      %s107 = sphi 0, %s106
      %s123 = sphi 0, %s107
      %s127 = sphi 0, %s127
      %s129 = sphi 0, %s127
      %s130 = sphi 0, %s129
      %s144 = sphi 0, %s130
      %s150 = sphi 0, %s152
      %s153 = sphi 0, %s150
      %s154 = sphi 0, %s153
      %s170 = sphi 0, %s154
    $region4: #{tpu_custom_call.1} parent=1 // loop_header_branch
      %18 = sbr.rel (%p16) target = $region8
    $region5: #{tpu_custom_call.1} parent=1 // loop_body
      %s20 = ssub.s32 %s15, 1
      %s21 = ssub.s32 %s15, 2
      %s22 = sadd.s32 %s15, 1
      %s23 = ssub.s32 %s15, %s22
      %p24 = scmp.eq.s32.totalorder %s23, 0
      %s26 = sadd.s32 %s25, 1
      %s27 = scalar_select %p24, %s25, %s26
      %p30 = pneg %p24
      %p31 = scmp.eq.s32.totalorder %s15, 1
      %p32 = por %p30, %p31
      %p33 = scmp.ne.s32.totalorder %s25, %s28
      %p34 = scmp.eq.s32.totalorder %s15, 0
      %p35 = por %p33, %p34
      %p36 = scmp.ne.s32.totalorder %s25, %s28
      %p37 = scmp.eq.s32.totalorder %s20, 1
      %p38 = por %p36, %p37
      %p39 = scmp.ne.s32.totalorder %s28, %s29
      %p40 = scmp.eq.s32.totalorder %s20, 0
      %p41 = por %p39, %p40
      %p42 = scmp.ne.s32.totalorder %s28, %s29
      %p43 = scmp.eq.s32.totalorder %s21, 1
      %p44 = por %p42, %p43
      %p46 = scmp.ne.s32.totalorder %s29, %s45
      %p47 = scmp.eq.s32.totalorder %s21, 0
      %p48 = por %p46, %p47
      %s49 = ssub.s32 %s15, %s22
      %p50 = scmp.eq.s32.totalorder %s49, 0
      %s52 = sadd.s32 %s51, 1
      %s53 = scalar_select %p50, %s51, %s52
      %p56 = pneg %p50
      %p57 = scmp.eq.s32.totalorder %s15, 1
      %p58 = por %p56, %p57
      %p59 = scmp.ne.s32.totalorder %s51, %s54
      %p60 = scmp.eq.s32.totalorder %s15, 0
      %p61 = por %p59, %p60
      %p62 = scmp.ne.s32.totalorder %s51, %s54
      %p63 = scmp.eq.s32.totalorder %s20, 1
      %p64 = por %p62, %p63
      %p65 = scmp.ne.s32.totalorder %s54, %s55
      %p66 = scmp.eq.s32.totalorder %s20, 0
      %p67 = por %p65, %p66
      %p68 = scmp.ne.s32.totalorder %s54, %s55
      %p69 = scmp.eq.s32.totalorder %s21, 1
      %p70 = por %p68, %p69
      %p72 = scmp.ne.s32.totalorder %s55, %s71
      %p73 = scmp.eq.s32.totalorder %s21, 0
      %p74 = por %p72, %p73
      %s75 = ssub.s32 %s15, %s22
      %p76 = scmp.eq.s32.totalorder %s75, 0
      %s78 = sadd.s32 %s77, 1
      %s79 = scalar_select %p76, %s77, %s78
      %p82 = pneg %p76
      %p83 = scmp.eq.s32.totalorder %s15, 1
      %p84 = por %p82, %p83
      %p85 = scmp.ne.s32.totalorder %s77, %s80
      %p86 = scmp.eq.s32.totalorder %s15, 0
      %p87 = por %p85, %p86
      %p88 = scmp.ne.s32.totalorder %s77, %s80
      %p89 = scmp.eq.s32.totalorder %s20, 1
      %p90 = por %p88, %p89
      %p91 = scmp.ne.s32.totalorder %s80, %s81
      %p92 = scmp.eq.s32.totalorder %s20, 0
      %p93 = por %p91, %p92
      %p94 = scmp.ne.s32.totalorder %s80, %s81
      %p95 = scmp.eq.s32.totalorder %s21, 1
      %p96 = por %p94, %p95
      %p98 = scmp.ne.s32.totalorder %s81, %s97
      %p99 = scmp.eq.s32.totalorder %s21, 0
      %p100 = por %p98, %p99
      %s101 = ssub.s32 %s15, %s22
      %p102 = scmp.eq.s32.totalorder %s101, 0
      %s104 = sadd.s32 %s103, 1
      %s105 = scalar_select %p102, %s103, %s104
      %p108 = pneg %p102
      %p109 = scmp.eq.s32.totalorder %s15, 1
      %p110 = por %p108, %p109
      %p111 = scmp.ne.s32.totalorder %s103, %s106
      %p112 = scmp.eq.s32.totalorder %s15, 0
      %p113 = por %p111, %p112
      %p114 = scmp.ne.s32.totalorder %s103, %s106
      %p115 = scmp.eq.s32.totalorder %s20, 1
      %p116 = por %p114, %p115
      %p117 = scmp.ne.s32.totalorder %s106, %s107
      %p118 = scmp.eq.s32.totalorder %s20, 0
      %p119 = por %p117, %p118
      %p120 = scmp.ne.s32.totalorder %s106, %s107
      %p121 = scmp.eq.s32.totalorder %s21, 1
      %p122 = por %p120, %p121
      %p124 = scmp.ne.s32.totalorder %s107, %s123
      %p125 = scmp.eq.s32.totalorder %s21, 0
      %p126 = por %p124, %p125
      %s128 = sadd.s32 %s127, 1
      %p131 = scmp.eq.s32.totalorder %s15, 1
      %p132 = scmp.ne.s32.totalorder %s127, %s129
      %p133 = scmp.eq.s32.totalorder %s15, 0
      %p134 = por %p132, %p133
      %p135 = scmp.ne.s32.totalorder %s127, %s129
      %p136 = scmp.eq.s32.totalorder %s20, 1
      %p137 = por %p135, %p136
      %p138 = scmp.ne.s32.totalorder %s129, %s130
      %p139 = scmp.eq.s32.totalorder %s20, 0
      %p140 = por %p138, %p139
      %p141 = scmp.ne.s32.totalorder %s129, %s130
      %p142 = scmp.eq.s32.totalorder %s21, 1
      %p143 = por %p141, %p142
      %p145 = scmp.ne.s32.totalorder %s130, %s144
      %p146 = scmp.eq.s32.totalorder %s21, 0
      %p147 = por %p145, %p146
      %s148 = ssub.s32 %s15, %s22
      %p149 = scmp.eq.s32.totalorder %s148, 0
      %s151 = sadd.s32 %s150, 1
      %s152 = scalar_select %p149, %s150, %s151
      %p155 = pneg %p149
      %p156 = scmp.eq.s32.totalorder %s15, 1
      %p157 = por %p155, %p156
      %p158 = scmp.ne.s32.totalorder %s150, %s153
      %p159 = scmp.eq.s32.totalorder %s15, 0
      %p160 = por %p158, %p159
      %p161 = scmp.ne.s32.totalorder %s150, %s153
      %p162 = scmp.eq.s32.totalorder %s20, 1
      %p163 = por %p161, %p162
      %p164 = scmp.ne.s32.totalorder %s153, %s154
      %p165 = scmp.eq.s32.totalorder %s20, 0
      %p166 = por %p164, %p165
      %p167 = scmp.ne.s32.totalorder %s153, %s154
      %p168 = scmp.eq.s32.totalorder %s21, 1
      %p169 = por %p167, %p168
      %p171 = scmp.ne.s32.totalorder %s154, %s170
      %p172 = scmp.eq.s32.totalorder %s21, 0
      %p173 = por %p171, %p172
      %p174 = scmp.le.s32.totalorder 1, %s15
      %p175 = scmp.lt.s32.totalorder %s15, 3
      %p176 = pnand %p174, %p175
      %p177 = pneg %p176
      // Predicated region
      $region9: #{tpu_custom_call.1} parent=5 // pred_check
        _
      $region10: #{tpu_custom_call.1} parent=5 // pred_check_branch
        %179 = sbr.rel (%p176) target = $region12
      $region11: #{tpu_custom_call.1} parent=5 // pred_region
        %s180 = ssub.s32 %s15, 1
        // Predicated region
        $region13: #{tpu_custom_call.1} parent=11 // pred_check
          %p181 = pneg %p140
        $region14: #{tpu_custom_call.1} parent=11 // pred_check_branch
          %183 = sbr.rel (%p181) target = $region16
        $region15: #{tpu_custom_call.1} parent=11 // pred_region
          %s185 = ssub.s32 256, 256
          %186 = vsyncadd [#allocation4], %s185
          %s188 = sshll.u32 [#allocation3], 4
          %s189 = int_to_ptr.vmem [resolvable:$true] %s188
          %191 = dma.hbm_to_vmem [thread:$0]  %s4, 256, %s189, [#allocation4]
        $region16: #{tpu_custom_call.1} parent=11 // pred_fallthru
          _
      $region12: #{tpu_custom_call.1} parent=5 // pred_fallthru
        _
      %p192 = scmp.lt.s32.totalorder %s15, 2
      // Predicated region
      $region17: #{tpu_custom_call.1} parent=5 // pred_check
        %p193 = pneg %p192
      $region18: #{tpu_custom_call.1} parent=5 // pred_check_branch
        %195 = sbr.rel (%p193) target = $region20
      $region19: #{tpu_custom_call.1} parent=5 // pred_region
        // Predicated region
        $region21: #{tpu_custom_call.1} parent=19 // pred_check
          %p196 = pneg %p35
        $region22: #{tpu_custom_call.1} parent=19 // pred_check_branch
          %198 = sbr.rel (%p196) target = $region24
        $region23: #{tpu_custom_call.1} parent=19 // pred_region
          %p199 = scmp.lt.s32.totalorder %s15, 1
          %s200 = scalar_select %p199, %s15, 1
          %s201 = smul.addr %s200, 2
          %s202 = smul.addr %s201, 8
          %s203 = scalar_lea.vmem %s0, %s202
        $region24: #{tpu_custom_call.1} parent=19 // pred_fallthru
          _
        // Predicated region
        $region25: #{tpu_custom_call.1} parent=19 // pred_check
          %p204 = pneg %p61
        $region26: #{tpu_custom_call.1} parent=19 // pred_check_branch
          %206 = sbr.rel (%p204) target = $region28
        $region27: #{tpu_custom_call.1} parent=19 // pred_region
          %p207 = scmp.lt.s32.totalorder %s15, 1
          %s208 = scalar_select %p207, %s15, 1
          %s209 = smul.addr %s208, 4
          %s210 = scalar_lea.vmem %s1, %s209
        $region28: #{tpu_custom_call.1} parent=19 // pred_fallthru
          _
        // Predicated region
        $region29: #{tpu_custom_call.1} parent=19 // pred_check
          %p211 = pneg %p87
        $region30: #{tpu_custom_call.1} parent=19 // pred_check_branch
          %213 = sbr.rel (%p211) target = $region32
        $region31: #{tpu_custom_call.1} parent=19 // pred_region
          %p214 = scmp.lt.s32.totalorder %s15, 1
          %s215 = scalar_select %p214, %s15, 1
          %s216 = smul.addr %s215, 2
          %s217 = smul.addr %s216, 4
          %s218 = scalar_lea.vmem %s2, %s217
        $region32: #{tpu_custom_call.1} parent=19 // pred_fallthru
          _
        // Predicated region
        $region33: #{tpu_custom_call.1} parent=19 // pred_check
          %p219 = pneg %p113
        $region34: #{tpu_custom_call.1} parent=19 // pred_check_branch
          %221 = sbr.rel (%p219) target = $region36
        $region35: #{tpu_custom_call.1} parent=19 // pred_region
          %p222 = scmp.lt.s32.totalorder %s15, 1
          %s223 = scalar_select %p222, %s15, 1
          %s224 = smul.addr %s223, 2
          %s225 = smul.addr %s224, 8
          %s226 = scalar_lea.vmem %s3, %s225
        $region36: #{tpu_custom_call.1} parent=19 // pred_fallthru
          _
      $region20: #{tpu_custom_call.1} parent=5 // pred_fallthru
        _
      %p227 = scmp.le.s32.totalorder 1, %s15
      %p228 = scmp.lt.s32.totalorder %s15, 3
      %p229 = pnand %p227, %p228
      %p230 = pneg %p229
      // Predicated region
      $region37: #{tpu_custom_call.1} parent=5 // pred_check
        _
      $region38: #{tpu_custom_call.1} parent=5 // pred_check_branch
        %232 = sbr.rel (%p229) target = $region40
      $region39: #{tpu_custom_call.1} parent=5 // pred_region
        %s233 = ssub.s32 %s15, 1
        // Predicated region
        $region41: #{tpu_custom_call.1} parent=39 // pred_check
          %p234 = pneg %p140
        $region42: #{tpu_custom_call.1} parent=39 // pred_check_branch
          %236 = sbr.rel (%p234) target = $region44
        $region43: #{tpu_custom_call.1} parent=39 // pred_region
          %237 = dma.done [#allocation4], 256
        $region44: #{tpu_custom_call.1} parent=39 // pred_fallthru
          _
        %p238 = scmp.lt.s32.totalorder %s20, 1
        %s239 = scalar_select %p238, %s20, 1
        %s240 = smul.addr %s239, 2
        %s241 = smul.addr %s240, 8
        %s242 = scalar_lea.vmem %s0, %s241
        %p243 = pneg %p41
        %p244 = pneg %p38
        %p245 = scmp.lt.s32.totalorder %s20, 1
        %s246 = scalar_select %p245, %s20, 1
        %s247 = smul.addr %s246, 4
        %s248 = scalar_lea.vmem %s1, %s247
        %p249 = pneg %p67
        %p250 = pneg %p64
        %p251 = scmp.lt.s32.totalorder %s20, 1
        %s252 = scalar_select %p251, %s20, 1
        %s253 = smul.addr %s252, 2
        %s254 = smul.addr %s253, 4
        %s255 = scalar_lea.vmem %s2, %s254
        %p256 = pneg %p93
        %p257 = pneg %p90
        %p258 = scmp.lt.s32.totalorder %s20, 1
        %s259 = scalar_select %p258, %s20, 1
        %s260 = smul.addr %s259, 2
        %s261 = smul.addr %s260, 8
        %s262 = scalar_lea.vmem %s3, %s261
        %p263 = pneg %p119
        %p264 = pneg %p116
        %p265 = pneg %p140
        %p266 = pneg %p137
        %p267 = pneg %p166
        %p268 = pneg %p163
        %s269 = sand.u32 %s153, 1
        %s270 = scalar_lea.sflag [#allocation5], %s269
        %s271 = sand.u32 %s153, 1
        %s272 = scalar_lea.vmem [#allocation6], %s271
        %p273 = scmp.lt.s32.totalorder %s20, 1
        %s274 = scalar_select %p273, %s20, 1
        %s275 = smul.addr %s274, 2
        %s276 = smul.addr %s275, 8
        %s277 = scalar_lea.vmem %s0, %s276
        %p278 = scmp.lt.s32.totalorder %s20, 1
        %s279 = scalar_select %p278, %s20, 1
        %s280 = smul.addr %s279, 4
        %s281 = scalar_lea.vmem %s1, %s280
        %p282 = scmp.lt.s32.totalorder %s20, 1
        %s283 = scalar_select %p282, %s20, 1
        %s284 = smul.addr %s283, 2
        %s285 = smul.addr %s284, 4
        %s286 = scalar_lea.vmem %s2, %s285
        %p287 = scmp.lt.s32.totalorder %s20, 1
        %s288 = scalar_select %p287, %s20, 1
        %s289 = smul.addr %s288, 2
        %s290 = smul.addr %s289, 8
        %s291 = scalar_lea.vmem %s3, %s290
        %v292 = vld [vmem:[%s281] sm:$0xf]
        %v293 = vld [vmem:[#allocation3] ss:$8 sm:$0x3]
        %s294 = scalar_lea.vmem [#allocation3], 1
        %v295 = vld [vmem:[%s294] ss:$8 sm:$0x3]
        %s296 = scalar_lea.vmem [#allocation3], 2
        %v297 = vld [vmem:[%s296] ss:$8 sm:$0x3]
        %s298 = scalar_lea.vmem [#allocation3], 3
        %v299 = vld [vmem:[%s298] ss:$8 sm:$0x3]
        %s300 = scalar_lea.vmem [#allocation3], 4
        %v301 = vld [vmem:[%s300] ss:$8 sm:$0x3]
        %s302 = scalar_lea.vmem [#allocation3], 5
        %v303 = vld [vmem:[%s302] ss:$8 sm:$0x3]
        %s304 = scalar_lea.vmem [#allocation3], 6
        %v305 = vld [vmem:[%s304] ss:$8 sm:$0x3]
        %s306 = scalar_lea.vmem [#allocation3], 7
        %v307 = vld [vmem:[%s306] ss:$8 sm:$0x3]
        %309 = vset.pattern.permute.xlu0 2
        %310 = vperm.xlu0 %309, %v292
        %v311 = vpop.permute.xlu0 %310
        %v314 = vlaneseq
        %v315 = vshrl.u32 %v314, 7
        %v316 = vsub.s32 0, %v315
        %v317 = vrot.slane %v297, %v316
        %v318 = vlaneseq
        %v319 = vshrl.u32 %v318, 7
        %v320 = vsub.s32 1, %v319
        %v321 = vrot.slane %v297, %v320
        %v324 = vmin.f32 %v311, %v317
        %v325 = vmin.f32 %v311, %v321
        %326 = vset.pattern.permute.xlu0 0
        %327 = vperm.xlu0 %326, %v292
        %v328 = vpop.permute.xlu0 %327
        %v331 = vlaneseq
        %v332 = vshrl.u32 %v331, 7
        %v333 = vsub.s32 0, %v332
        %v334 = vrot.slane %v293, %v333
        %v335 = vlaneseq
        %v336 = vshrl.u32 %v335, 7
        %v337 = vsub.s32 1, %v336
        %v338 = vrot.slane %v293, %v337
        %v341 = vmax.f32 %v328, %v334
        %v342 = vmax.f32 %v328, %v338
        %v343 = vsub.f32 %v324, %v341
        %v344 = vsub.f32 %v325, %v342
        %v345 = vmax.f32 %v343, 0.0
        %v346 = vmax.f32 %v344, 0.0
        %347 = vset.pattern.permute.xlu0 3
        %348 = vperm.xlu0 %347, %v292
        %v349 = vpop.permute.xlu0 %348
        %v352 = vlaneseq
        %v353 = vshrl.u32 %v352, 7
        %v354 = vsub.s32 0, %v353
        %v355 = vrot.slane %v299, %v354
        %v356 = vlaneseq
        %v357 = vshrl.u32 %v356, 7
        %v358 = vsub.s32 1, %v357
        %v359 = vrot.slane %v299, %v358
        %v362 = vmin.f32 %v349, %v355
        %v363 = vmin.f32 %v349, %v359
        %364 = vset.pattern.permute.xlu0 1
        %365 = vperm.xlu0 %364, %v292
        %v366 = vpop.permute.xlu0 %365
        %v369 = vlaneseq
        %v370 = vshrl.u32 %v369, 7
        %v371 = vsub.s32 0, %v370
        %v372 = vrot.slane %v295, %v371
        %v373 = vlaneseq
        %v374 = vshrl.u32 %v373, 7
        %v375 = vsub.s32 1, %v374
        %v376 = vrot.slane %v295, %v375
        %v379 = vmax.f32 %v366, %v372
        %v380 = vmax.f32 %v366, %v376
        %v381 = vsub.f32 %v362, %v379
        %v382 = vsub.f32 %v363, %v380
        %v383 = vmax.f32 %v381, 0.0
        %v384 = vmax.f32 %v382, 0.0
        %v385 = vmul.f32 %v345, %v383
        %v386 = vmul.f32 %v346, %v384
        %387 = vrot.lane.b32.xlu0 %v292, 2
        %v388 = vpop.permute.xlu0 %387
        %v390 = vsub.f32 %v292, %v388
        %392 = vrot.lane.b32.xlu0 %v390, 127
        %v393 = vpop.permute.xlu0 %392
        %v395 = vmul.f32 %v390, %v393
        %v396 = vsub.f32 %v297, %v293
        %v397 = vsub.f32 %v299, %v295
        %v398 = vmul.f32 %v396, %v397
        %400 = vset.pattern.permute.xlu0 2
        %401 = vperm.xlu0 %400, %v395
        %v402 = vpop.permute.xlu0 %401
        %v405 = vlaneseq
        %v406 = vshrl.u32 %v405, 7
        %v407 = vsub.s32 0, %v406
        %v408 = vrot.slane %v398, %v407
        %v409 = vlaneseq
        %v410 = vshrl.u32 %v409, 7
        %v411 = vsub.s32 1, %v410
        %v412 = vrot.slane %v398, %v411
        %v415 = vadd.f32 %v402, %v408
        %v416 = vadd.f32 %v402, %v412
        %v417 = vsub.f32 %v415, %v385
        %v418 = vsub.f32 %v416, %v386
        %v419 = vrcp.pop %v417
        %v420 = vmul.f32 %v385, %v419
        %v421 = vrcp.pop %v418
        %v422 = vmul.f32 %v386, %v421
        %v423 = vlaneseq
        %v424 = vshrl.u32 %v423, 7
        %v425 = vlaneseq
        %v426 = vand.u32 %v425, 127
        %v427 = vadd.s32 %v426, 128
        %vm428 = vcmask 1043456
        %v429 = vsel %vm428, %v420, -inf
        %v430 = vrot.slane %v429, 4
        %v431 = vmax.f32 %v429, %v430
        %v432 = vrot.slane %v431, 2
        %v433 = vmax.f32 %v431, %v432
        %v434 = vrot.slane %v433, 1
        %v435 = vmax.f32 %v433, %v434
        %v436 = vsel %vm428, %v422, -inf
        %v437 = vrot.slane %v436, 4
        %v438 = vmax.f32 %v436, %v437
        %v439 = vrot.slane %v438, 2
        %v440 = vmax.f32 %v438, %v439
        %v441 = vrot.slane %v440, 1
        %v442 = vmax.f32 %v440, %v441
        %vm443 = vcmp.eq.f32.partialorder %v420, %v435
        %vm444 = vcmp.eq.f32.partialorder %v422, %v442
        %v445 = vsel %vm443, %v424, 4
        %v446 = vsel %vm444, %v424, 4
        %v447 = vsel %vm428, %v445, 2147483647
        %v448 = vrot.slane %v447, 4
        %vm449 = vcmp.lt.s32.totalorder %v447, %v448
        %v450 = vsel %vm449, %v447, %v448
        %v451 = vrot.slane %v450, 2
        %vm452 = vcmp.lt.s32.totalorder %v450, %v451
        %v453 = vsel %vm452, %v450, %v451
        %v454 = vrot.slane %v453, 1
        %vm455 = vcmp.lt.s32.totalorder %v453, %v454
        %v456 = vsel %vm455, %v453, %v454
        %v457 = vsel %vm428, %v446, 2147483647
        %v458 = vrot.slane %v457, 4
        %vm459 = vcmp.lt.s32.totalorder %v457, %v458
        %v460 = vsel %vm459, %v457, %v458
        %v461 = vrot.slane %v460, 2
        %vm462 = vcmp.lt.s32.totalorder %v460, %v461
        %v463 = vsel %vm462, %v460, %v461
        %v464 = vrot.slane %v463, 1
        %vm465 = vcmp.lt.s32.totalorder %v463, %v464
        %v466 = vsel %vm465, %v463, %v464
        %v467 = vmax.f32 %v429, %v436
        %468 = vmax.xlane.f32.xlu0 %v467
        %v469 = vpop.xlane.xlu0 %468
        %vm470 = vcmp.eq.f32.partialorder %v420, %v469
        %vm471 = vcmp.eq.f32.partialorder %v422, %v469
        %v472 = vsel %vm470, %v426, 256
        %v473 = vsel %vm471, %v427, 256
        %v474 = vsel %vm428, %v472, 2147483647
        %v475 = vsel %vm428, %v473, 2147483647
        %vm476 = vcmp.lt.s32.totalorder %v474, %v475
        %v477 = vsel %vm476, %v474, %v475
        %v478 = vand.u32 %v477, 65535
        %v479 = vshra.s32 %v477, 16
        %v480 = vcvt.s32.f32 %v478
        %v481 = vcvt.s32.f32 %v479
        %482 = vmin.xlane.f32.xlu0 %v481
        %v483 = vpop.xlane.xlu0 %482
        %vm484 = vcmp.eq.f32.partialorder %v481, %v483
        %v485 = vsel %vm484, %v480, inf
        %486 = vmin.xlane.f32.xlu0 %v485
        %v487 = vpop.xlane.xlu0 %486
        %v488 = vcvt.f32.s32 %v487
        %v489 = vcvt.f32.s32 %v483
        %v490 = vshll.u32 %v489, 16
        %v491 = vadd.s32 %v490, %v488
        %vm492 = vcmp.eq.s32.totalorder %v426, %v491
        %vm493 = vcmp.eq.s32.totalorder %v427, %v491
        %v494 = vsel %vm492, %v424, 4294967295
        %v495 = vsel %vm493, %v424, 4294967295
        %v496 = vsel %vm428, %v494, 2147483648
        %v497 = vrot.slane %v496, 4
        %vm498 = vcmp.gt.s32.totalorder %v496, %v497
        %v499 = vsel %vm498, %v496, %v497
        %v500 = vrot.slane %v499, 2
        %vm501 = vcmp.gt.s32.totalorder %v499, %v500
        %v502 = vsel %vm501, %v499, %v500
        %v503 = vrot.slane %v502, 1
        %vm504 = vcmp.gt.s32.totalorder %v502, %v503
        %v505 = vsel %vm504, %v502, %v503
        %v506 = vsel %vm428, %v495, 2147483648
        %v507 = vrot.slane %v506, 4
        %vm508 = vcmp.gt.s32.totalorder %v506, %v507
        %v509 = vsel %vm508, %v506, %v507
        %v510 = vrot.slane %v509, 2
        %vm511 = vcmp.gt.s32.totalorder %v509, %v510
        %v512 = vsel %vm511, %v509, %v510
        %v513 = vrot.slane %v512, 1
        %vm514 = vcmp.gt.s32.totalorder %v512, %v513
        %v515 = vsel %vm514, %v512, %v513
        %vm516 = vcmp.ge.s32.totalorder %v505, 0
        %vm517 = vcmp.ge.s32.totalorder %v515, 0
        %v518 = vsel %vm516, %v505, %v456
        %v519 = vsel %vm517, %v515, %v466
        %v520 = vsel %vm516, 1.0, %v435
        %v521 = vsel %vm517, 1.0, %v442
        %v522 = vld [vmem:[%s277] sm:$0xff]
        %v523 = vld [vmem:[%s277 + $0x8] sm:$0xff]
        %vm524 = vcmp.eq.s32.totalorder %v424, %v518
        %vm525 = vcmp.eq.s32.totalorder %v424, %v519
        %v526 = vsel %vm524, 1, 0
        %v527 = vsel %vm525, 1, 0
        %v528 = vcvt.s32.f32 %v526
        %v529 = vcvt.s32.f32 %v527
        %vm530 = vcmask 64512
        %v532 = vsel %vm530, %v522, 0
        %v535 = vsel %vm530, %v523, 0
        %537 = vmatprep.subr.mxu0 %v529
        %538 = vmatpush1.msra.mxu0 %v528
        %539 = vmatprep.subr.mxu0 0.0
        %540 = vmatpush1.msra.mxu0 0.0
        %541 = vmatprep.subr.mxu0 0.0
        %542 = vmatpush1.msra.mxu0 0.0
        %543 = vmatprep.subr.mxu0 0.0
        %544 = vmatpush1.msra.mxu0 0.0
        %545 = vmatprep.subr.mxu0 0.0
        %546 = vmatpush1.msra.mxu0 0.0
        %547 = vmatprep.subr.mxu0 0.0
        %548 = vmatpush1.msra.mxu0 0.0
        %549 = vmatprep.subr.mxu0 0.0
        %550 = vmatpush1.msra.mxu0 0.0
        %551 = vmatprep.subr.mxu0 0.0
        %552 = vmatpush1.msra.mxu0 0.0
        %553 = vmatprep.subr.mxu0 0.0
        %554 = vmatpush1.msra.mxu0 0.0
        %555 = vmatprep.subr.mxu0 0.0
        %556 = vmatpush1.msra.mxu0 0.0
        %557 = vmatprep.subr.mxu0 0.0
        %558 = vmatpush1.msra.mxu0 0.0
        %559 = vmatprep.subr.mxu0 0.0
        %560 = vmatpush1.msra.mxu0 0.0
        %561 = vmatprep.subr.mxu0 0.0
        %562 = vmatpush1.msra.mxu0 0.0
        %563 = vmatprep.subr.mxu0 0.0
        %564 = vmatpush1.msra.mxu0 0.0
        %565 = vmatprep.subr.mxu0 0.0
        %566 = vmatpush1.msra.mxu0 0.0
        %567 = vmatprep.subr.mxu0 0.0
        %568 = vmatpush1.msra.mxu0 0.0
        %569 = vmatprep.subr.mxu0 0.0
        %570 = vmatpush1.msra.mxu0 0.0
        %571 = vmatprep.subr.mxu0 0.0
        %572 = vmatpush1.msra.mxu0 0.0
        %573 = vmatprep.subr.mxu0 0.0
        %574 = vmatpush1.msra.mxu0 0.0
        %575 = vmatprep.subr.mxu0 0.0
        %576 = vmatpush1.msra.mxu0 0.0
        %577 = vmatprep.subr.mxu0 0.0
        %578 = vmatpush1.msra.mxu0 0.0
        %579 = vmatprep.subr.mxu0 0.0
        %580 = vmatpush1.msra.mxu0 0.0
        %581 = vmatprep.subr.mxu0 0.0
        %582 = vmatpush1.msra.mxu0 0.0
        %583 = vmatprep.subr.mxu0 0.0
        %584 = vmatpush1.msra.mxu0 0.0
        %585 = vmatprep.subr.mxu0 0.0
        %586 = vmatpush1.msra.mxu0 0.0
        %587 = vmatprep.subr.mxu0 0.0
        %588 = vmatpush1.msra.mxu0 0.0
        %589 = vmatprep.subr.mxu0 0.0
        %590 = vmatpush1.msra.mxu0 0.0
        %591 = vmatprep.subr.mxu0 0.0
        %592 = vmatpush1.msra.mxu0 0.0
        %593 = vmatprep.subr.mxu0 0.0
        %594 = vmatpush1.msra.mxu0 0.0
        %595 = vmatprep.subr.mxu0 0.0
        %596 = vmatpush1.msra.mxu0 0.0
        %597 = vmatprep.subr.mxu0 0.0
        %598 = vmatpush1.msra.mxu0 0.0
        %599 = vmatprep.subr.mxu0 0.0
        %600 = vmatpush1.msra.mxu0 0.0
        %601 = vmatprep.mubr.f32.mxu0 0.0
        %602 = vmatmul.mubr.f32.gmra.mrb[0].mxu0 %v532
        %v603 = vpop.f32.mrb[0].mxu0
        %v604 = vadd.f32 0.0, %v603
        %v605 = vpop.f32.mrb[0].mxu0
        %v606 = vadd.f32 0.0, %v605
        %607 = vmatprep.mubr.f32.mxu0 0.0
        %608 = vmatmul.mubr.f32.gmra.mrb[0].mxu0 %v535
        %v609 = vpop.f32.mrb[0].mxu0
        %v610 = vadd.f32 0.0, %v609
        %v611 = vpop.f32.mrb[0].mxu0
        %v612 = vadd.f32 0.0, %v611
        %613 = vdwg.mxu0
        %v614 = vadd.f32 %v604, %v610
        %v615 = vadd.f32 %v606, %v612
        %v616 = vadd.f32 %v614, 0.5
        %v617 = vadd.f32 %v615, 0.5
        %v618 = vcvt.f32.s32.to.zero.pseudo %v616
        %v619 = vcvt.f32.s32.to.zero.pseudo %v617
        %vm620 = vcmp.lt.f32.partialorder %v520, 0.5
        %vm621 = vcmp.lt.f32.partialorder %v521, 0.5
        %v622 = vsel %vm620, 0, %v618
        %v623 = vsel %vm621, 0, %v619
        %vm624 = vcmp.ne.s32.totalorder %v622, 0
        %vm625 = vcmp.ne.s32.totalorder %v623, 0
        %v626 = vsel %vm624, 1, 0
        %v627 = vsel %vm625, 1, 0
        %v628 = vcvt.s32.f32 %v626
        %v629 = vcvt.s32.f32 %v627
        %v632 = vrot.slane %v614, 2
        %v633 = vrot.slane %v615, 2
        %v636 = vadd.f32 %v614, %v632
        %v637 = vadd.f32 %v615, %v633
        %v638 = vmul.f32 %v636, 0.5
        %v639 = vmul.f32 %v637, 0.5
        %v640 = vrot.slane %v614, 6
        %v641 = vrot.slane %v615, 6
        %v644 = vsub.f32 %v614, %v640
        %v645 = vsub.f32 %v615, %v641
        %v647 = vlaneseq
        %v648 = vshrl.u32 %v647, 7
        %v649 = vsub.s32 0, %v648
        %v650 = vrot.slane %v301, %v649
        %v651 = vlaneseq
        %v652 = vshrl.u32 %v651, 7
        %v653 = vsub.s32 1, %v652
        %v654 = vrot.slane %v301, %v653
        %v657 = vsub.f32 %v638, %v650
        %v658 = vsub.f32 %v639, %v654
        %v659 = vmul.f32 %v657, 10.0
        %v660 = vmul.f32 %v658, 10.0
        %v662 = vlaneseq
        %v663 = vshrl.u32 %v662, 7
        %v664 = vsub.s32 0, %v663
        %v665 = vrot.slane %v305, %v664
        %v666 = vlaneseq
        %v667 = vshrl.u32 %v666, 7
        %v668 = vsub.s32 1, %v667
        %v669 = vrot.slane %v305, %v668
        %v672 = vrcp.pop %v665
        %v673 = vmul.f32 %v659, %v672
        %v674 = vrcp.pop %v669
        %v675 = vmul.f32 %v660, %v674
        %v677 = vlaneseq
        %v678 = vshrl.u32 %v677, 7
        %v679 = vsub.s32 0, %v678
        %v680 = vrot.slane %v303, %v679
        %v681 = vlaneseq
        %v682 = vshrl.u32 %v681, 7
        %v683 = vsub.s32 1, %v682
        %v684 = vrot.slane %v303, %v683
        %v687 = vsub.f32 %v638, %v680
        %v688 = vsub.f32 %v639, %v684
        %v689 = vmul.f32 %v687, 10.0
        %v690 = vmul.f32 %v688, 10.0
        %v692 = vlaneseq
        %v693 = vshrl.u32 %v692, 7
        %v694 = vsub.s32 0, %v693
        %v695 = vrot.slane %v307, %v694
        %v696 = vlaneseq
        %v697 = vshrl.u32 %v696, 7
        %v698 = vsub.s32 1, %v697
        %v699 = vrot.slane %v307, %v698
        %v702 = vrcp.pop %v695
        %v703 = vmul.f32 %v689, %v702
        %v704 = vrcp.pop %v699
        %v705 = vmul.f32 %v690, %v704
        %v706 = vmul.f32 %v644, %v672
        %v707 = vmul.f32 %v645, %v674
        %v708 = vlog2.pop %v706
        %v709 = vmul.f32 %v708, 0.6931472
        %v710 = vlog2.pop %v707
        %v711 = vmul.f32 %v710, 0.6931472
        %v712 = vmul.f32 %v709, 5.0
        %v713 = vmul.f32 %v711, 5.0
        %v714 = vmul.f32 %v644, %v702
        %v715 = vmul.f32 %v645, %v704
        %v716 = vlog2.pop %v714
        %v717 = vmul.f32 %v716, 0.6931472
        %v718 = vlog2.pop %v715
        %v719 = vmul.f32 %v718, 0.6931472
        %v720 = vmul.f32 %v717, 5.0
        %v721 = vmul.f32 %v719, 5.0
        %v722 = vld [vmem:[%s286] sm:$0xff]
        %v725 = vcombine.low %v673, %v675
        %v727 = vsub.f32 %v722, %v725
        %v728 = vand.u32 2147483647, %v727
        %v731 = vcombine.low %v703, %v705
        %v733 = vsub.f32 %v722, %v731
        %v734 = vand.u32 2147483647, %v733
        %v736 = vrot.slane %v734, 5
        %v737 = vrot.slane %v736, 4
        %v739 = vadd.f32 %v728, %v737
        %v742 = vcombine.low %v712, %v713
        %v744 = vsub.f32 %v722, %v742
        %v745 = vand.u32 2147483647, %v744
        %v747 = vrot.slane %v745, 6
        %v748 = vrot.slane %v747, 4
        %v750 = vadd.f32 %v739, %v748
        %v753 = vcombine.low %v720, %v721
        %v755 = vsub.f32 %v722, %v753
        %v756 = vand.u32 2147483647, %v755
        %v758 = vrot.slane %v756, 7
        %v759 = vrot.slane %v758, 4
        %v761 = vadd.f32 %v750, %v759
        %v763 = vlaneseq
        %v764 = vshrl.u32 %v763, 7
        %v765 = vsub.s32 0, %v764
        %v766 = vrot.slane %v761, %v765
        %v767 = vlaneseq
        %v768 = vshrl.u32 %v767, 7
        %v769 = vsub.s32 4, %v768
        %v770 = vrot.slane %v761, %v769
        %v773 = vsel %vm624, %v766, 0.0
        %v774 = vsel %vm625, %v770, 0.0
        %vm775 = vcmask 1044484
        %v776 = vsel %vm775, %v773, 0.0
        %v777 = vsel %vm775, %v774, 0.0
        %v778 = vadd.f32 %v776, %v777
        %779 = vadd.xlane.f32.xlu0 %v778
        %v780 = vpop.xlane.xlu0 %779
        %v781 = vld [vmem:[%s291] sm:$0xff]
        %v782 = vld [vmem:[%s291 + $0x8] sm:$0xff]
        %v783 = vrot.slane %v781, 4
        %v784 = vmax.f32 %v781, %v783
        %v785 = vrot.slane %v784, 2
        %v786 = vmax.f32 %v784, %v785
        %v787 = vrot.slane %v786, 1
        %v788 = vmax.f32 %v786, %v787
        %v789 = vrot.slane %v782, 4
        %v790 = vmax.f32 %v782, %v789
        %v791 = vrot.slane %v790, 2
        %v792 = vmax.f32 %v790, %v791
        %v793 = vrot.slane %v792, 1
        %v794 = vmax.f32 %v792, %v793
        %v795 = vsub.f32 %v781, %v788
        %v796 = vsub.f32 %v782, %v794
        %v797 = vmul.f32 %v795, 1.442695
        %v798 = vpow.pop %v797
        %v799 = vmul.f32 %v796, 1.442695
        %v800 = vpow.pop %v799
        %v801 = vrot.slane %v798, 4
        %v802 = vadd.f32 %v798, %v801
        %v803 = vrot.slane %v802, 2
        %v804 = vadd.f32 %v802, %v803
        %v805 = vrot.slane %v804, 1
        %v806 = vadd.f32 %v804, %v805
        %v807 = vrot.slane %v800, 4
        %v808 = vadd.f32 %v800, %v807
        %v809 = vrot.slane %v808, 2
        %v810 = vadd.f32 %v808, %v809
        %v811 = vrot.slane %v810, 1
        %v812 = vadd.f32 %v810, %v811
        %v813 = vlog2.pop %v806
        %v814 = vmul.f32 %v813, 0.6931472
        %v815 = vlog2.pop %v812
        %v816 = vmul.f32 %v815, 0.6931472
        %v817 = vadd.f32 %v788, %v814
        %v818 = vadd.f32 %v794, %v816
        %v819 = vlaneseq
        %v820 = vshrl.u32 %v819, 7
        %v821 = vsub.s32 4, %v820
        %v822 = vrot.slane %v622, %v821
        %v823 = vlaneseq
        %v824 = vshrl.u32 %v823, 7
        %v825 = vsub.s32 4, %v824
        %v826 = vrot.slane %v623, %v825
        %vm827 = vcmp.eq.s32.totalorder %v424, %v822
        %vm828 = vcmp.eq.s32.totalorder %v424, %v826
        %v829 = vsel %vm827, %v781, 0.0
        %v830 = vsel %vm828, %v782, 0.0
        %v831 = vrot.slane %v829, 4
        %v832 = vadd.f32 %v829, %v831
        %v833 = vrot.slane %v832, 2
        %v834 = vadd.f32 %v832, %v833
        %v835 = vrot.slane %v834, 1
        %v836 = vadd.f32 %v834, %v835
        %v837 = vrot.slane %v830, 4
        %v838 = vadd.f32 %v830, %v837
        %v839 = vrot.slane %v838, 2
        %v840 = vadd.f32 %v838, %v839
        %v841 = vrot.slane %v840, 1
        %v842 = vadd.f32 %v840, %v841
        %v843 = vsub.f32 %v817, %v836
        %v844 = vsub.f32 %v818, %v842
        %v845 = vsel %vm775, %v628, 0.0
        %v846 = vsel %vm775, %v629, 0.0
        %v847 = vadd.f32 %v845, %v846
        %848 = vadd.xlane.f32.xlu0 %v847
        %v849 = vpop.xlane.xlu0 %848
        %v850 = vsel %vm624, %v843, 0.0
        %v851 = vsel %vm625, %v844, 0.0
        %v852 = vsel %vm775, %v850, 0.0
        %v853 = vsel %vm775, %v851, 0.0
        %v854 = vadd.f32 %v852, %v853
        %855 = vadd.xlane.f32.xlu0 %v854
        %v856 = vpop.xlane.xlu0 %855
        %v857 = vmax.f32 %v843, 0.0
        %v858 = vmax.f32 %v844, 0.0
        %v859 = vsel %vm624, 0.0, %v857
        %v860 = vsel %vm625, 0.0, %v858
        %861 = vst [vmem:[#allocation2 - $0x4] sm:$0x10] %v859
        %862 = vst [vmem:[#allocation2 - $0x3] sm:$0x10] %v860
        %v863 = vmul.f32 %v849, 3.0
        %v864 = vceil.f32 %v863
        %v865 = vld [vmem:[#allocation2] sm:$0x3]
        %vm867 = vcmp.ge.s32.totalorder %v865, 1073741824
        %v868 = vsel %vm867, 1, 0
        %v869 = vcvt.s32.f32 %v868
        %vm870 = vcmask 1041408
        %v871 = vsel %vm870, %v869, 0.0
        %v872 = vrot.slane %v871, 4
        %v873 = vadd.f32 %v871, %v872
        %v874 = vrot.slane %v873, 2
        %v875 = vadd.f32 %v873, %v874
        %v876 = vrot.slane %v875, 1
        %v877 = vadd.f32 %v875, %v876
        %878 = vadd.xlane.f32.xlu0 %v877
        %v879 = vpop.xlane.xlu0 %878
        %vm880 = vcmp.ge.f32.partialorder %v879, %v864
        %v881 = vsel %vm880, 1073741824, 0
        %v882 = vadd.s32 %v881, 536870912
        %v883 = vlaneseq
        %v884 = vshrl.u32 %v883, 7
        %v885 = vsub.s32 4, %v884
        %v886 = vrot.slane %v882, %v885
        %vm887 = vcmp.ge.s32.totalorder %v865, %v886
        %v888 = vsel %vm887, 1, 0
        %v889 = vcvt.s32.f32 %v888
        %v890 = vsel %vm870, %v889, 0.0
        %v891 = vrot.slane %v890, 4
        %v892 = vadd.f32 %v890, %v891
        %v893 = vrot.slane %v892, 2
        %v894 = vadd.f32 %v892, %v893
        %v895 = vrot.slane %v894, 1
        %v896 = vadd.f32 %v894, %v895
        %897 = vadd.xlane.f32.xlu0 %v896
        %v898 = vpop.xlane.xlu0 %897
        %vm899 = vcmp.ge.f32.partialorder %v898, %v864
        %v900 = vsel %vm899, %v882, %v881
        %v901 = vadd.s32 %v900, 268435456
        %v902 = vlaneseq
        %v903 = vshrl.u32 %v902, 7
        %v904 = vsub.s32 4, %v903
        %v905 = vrot.slane %v901, %v904
        %vm906 = vcmp.ge.s32.totalorder %v865, %v905
        %v907 = vsel %vm906, 1, 0
        %v908 = vcvt.s32.f32 %v907
        %v909 = vsel %vm870, %v908, 0.0
        %v910 = vrot.slane %v909, 4
        %v911 = vadd.f32 %v909, %v910
        %v912 = vrot.slane %v911, 2
        %v913 = vadd.f32 %v911, %v912
        %v914 = vrot.slane %v913, 1
        %v915 = vadd.f32 %v913, %v914
        %916 = vadd.xlane.f32.xlu0 %v915
        %v917 = vpop.xlane.xlu0 %916
        %vm918 = vcmp.ge.f32.partialorder %v917, %v864
        %v919 = vsel %vm918, %v901, %v900
        %v920 = vadd.s32 %v919, 134217728
        %v921 = vlaneseq
        %v922 = vshrl.u32 %v921, 7
        %v923 = vsub.s32 4, %v922
        %v924 = vrot.slane %v920, %v923
        %vm925 = vcmp.ge.s32.totalorder %v865, %v924
        %v926 = vsel %vm925, 1, 0
        %v927 = vcvt.s32.f32 %v926
        %v928 = vsel %vm870, %v927, 0.0
        %v929 = vrot.slane %v928, 4
        %v930 = vadd.f32 %v928, %v929
        %v931 = vrot.slane %v930, 2
        %v932 = vadd.f32 %v930, %v931
        %v933 = vrot.slane %v932, 1
        %v934 = vadd.f32 %v932, %v933
        %935 = vadd.xlane.f32.xlu0 %v934
        %v936 = vpop.xlane.xlu0 %935
        %vm937 = vcmp.ge.f32.partialorder %v936, %v864
        %v938 = vsel %vm937, %v920, %v919
        %v939 = vadd.s32 %v938, 67108864
        %v940 = vlaneseq
        %v941 = vshrl.u32 %v940, 7
        %v942 = vsub.s32 4, %v941
        %v943 = vrot.slane %v939, %v942
        %vm944 = vcmp.ge.s32.totalorder %v865, %v943
        %v945 = vsel %vm944, 1, 0
        %v946 = vcvt.s32.f32 %v945
        %v947 = vsel %vm870, %v946, 0.0
        %v948 = vrot.slane %v947, 4
        %v949 = vadd.f32 %v947, %v948
        %v950 = vrot.slane %v949, 2
        %v951 = vadd.f32 %v949, %v950
        %v952 = vrot.slane %v951, 1
        %v953 = vadd.f32 %v951, %v952
        %954 = vadd.xlane.f32.xlu0 %v953
        %v955 = vpop.xlane.xlu0 %954
        %vm956 = vcmp.ge.f32.partialorder %v955, %v864
        %v957 = vsel %vm956, %v939, %v938
        %v958 = vadd.s32 %v957, 33554432
        %v959 = vlaneseq
        %v960 = vshrl.u32 %v959, 7
        %v961 = vsub.s32 4, %v960
        %v962 = vrot.slane %v958, %v961
        %vm963 = vcmp.ge.s32.totalorder %v865, %v962
        %v964 = vsel %vm963, 1, 0
        %v965 = vcvt.s32.f32 %v964
        %v966 = vsel %vm870, %v965, 0.0
        %v967 = vrot.slane %v966, 4
        %v968 = vadd.f32 %v966, %v967
        %v969 = vrot.slane %v968, 2
        %v970 = vadd.f32 %v968, %v969
        %v971 = vrot.slane %v970, 1
        %v972 = vadd.f32 %v970, %v971
        %973 = vadd.xlane.f32.xlu0 %v972
        %v974 = vpop.xlane.xlu0 %973
        %vm975 = vcmp.ge.f32.partialorder %v974, %v864
        %v976 = vsel %vm975, %v958, %v957
        %v977 = vadd.s32 %v976, 16777216
        %v978 = vlaneseq
        %v979 = vshrl.u32 %v978, 7
        %v980 = vsub.s32 4, %v979
        %v981 = vrot.slane %v977, %v980
        %vm982 = vcmp.ge.s32.totalorder %v865, %v981
        %v983 = vsel %vm982, 1, 0
        %v984 = vcvt.s32.f32 %v983
        %v985 = vsel %vm870, %v984, 0.0
        %v986 = vrot.slane %v985, 4
        %v987 = vadd.f32 %v985, %v986
        %v988 = vrot.slane %v987, 2
        %v989 = vadd.f32 %v987, %v988
        %v990 = vrot.slane %v989, 1
        %v991 = vadd.f32 %v989, %v990
        %992 = vadd.xlane.f32.xlu0 %v991
        %v993 = vpop.xlane.xlu0 %992
        %vm994 = vcmp.ge.f32.partialorder %v993, %v864
        %v995 = vsel %vm994, %v977, %v976
        %v996 = vadd.s32 %v995, 8388608
        %v997 = vlaneseq
        %v998 = vshrl.u32 %v997, 7
        %v999 = vsub.s32 4, %v998
        %v1000 = vrot.slane %v996, %v999
        %vm1001 = vcmp.ge.s32.totalorder %v865, %v1000
        %v1002 = vsel %vm1001, 1, 0
        %v1003 = vcvt.s32.f32 %v1002
        %v1004 = vsel %vm870, %v1003, 0.0
        %v1005 = vrot.slane %v1004, 4
        %v1006 = vadd.f32 %v1004, %v1005
        %v1007 = vrot.slane %v1006, 2
        %v1008 = vadd.f32 %v1006, %v1007
        %v1009 = vrot.slane %v1008, 1
        %v1010 = vadd.f32 %v1008, %v1009
        %1011 = vadd.xlane.f32.xlu0 %v1010
        %v1012 = vpop.xlane.xlu0 %1011
        %vm1013 = vcmp.ge.f32.partialorder %v1012, %v864
        %v1014 = vsel %vm1013, %v996, %v995
        %v1015 = vadd.s32 %v1014, 4194304
        %v1016 = vlaneseq
        %v1017 = vshrl.u32 %v1016, 7
        %v1018 = vsub.s32 4, %v1017
        %v1019 = vrot.slane %v1015, %v1018
        %vm1020 = vcmp.ge.s32.totalorder %v865, %v1019
        %v1021 = vsel %vm1020, 1, 0
        %v1022 = vcvt.s32.f32 %v1021
        %v1023 = vsel %vm870, %v1022, 0.0
        %v1024 = vrot.slane %v1023, 4
        %v1025 = vadd.f32 %v1023, %v1024
        %v1026 = vrot.slane %v1025, 2
        %v1027 = vadd.f32 %v1025, %v1026
        %v1028 = vrot.slane %v1027, 1
        %v1029 = vadd.f32 %v1027, %v1028
        %1030 = vadd.xlane.f32.xlu0 %v1029
        %v1031 = vpop.xlane.xlu0 %1030
        %vm1032 = vcmp.ge.f32.partialorder %v1031, %v864
        %v1033 = vsel %vm1032, %v1015, %v1014
        %v1034 = vadd.s32 %v1033, 2097152
        %v1035 = vlaneseq
        %v1036 = vshrl.u32 %v1035, 7
        %v1037 = vsub.s32 4, %v1036
        %v1038 = vrot.slane %v1034, %v1037
        %vm1039 = vcmp.ge.s32.totalorder %v865, %v1038
        %v1040 = vsel %vm1039, 1, 0
        %v1041 = vcvt.s32.f32 %v1040
        %v1042 = vsel %vm870, %v1041, 0.0
        %v1043 = vrot.slane %v1042, 4
        %v1044 = vadd.f32 %v1042, %v1043
        %v1045 = vrot.slane %v1044, 2
        %v1046 = vadd.f32 %v1044, %v1045
        %v1047 = vrot.slane %v1046, 1
        %v1048 = vadd.f32 %v1046, %v1047
        %1049 = vadd.xlane.f32.xlu0 %v1048
        %v1050 = vpop.xlane.xlu0 %1049
        %vm1051 = vcmp.ge.f32.partialorder %v1050, %v864
        %v1052 = vsel %vm1051, %v1034, %v1033
        %v1053 = vadd.s32 %v1052, 1048576
        %v1054 = vlaneseq
        %v1055 = vshrl.u32 %v1054, 7
        %v1056 = vsub.s32 4, %v1055
        %v1057 = vrot.slane %v1053, %v1056
        %vm1058 = vcmp.ge.s32.totalorder %v865, %v1057
        %v1059 = vsel %vm1058, 1, 0
        %v1060 = vcvt.s32.f32 %v1059
        %v1061 = vsel %vm870, %v1060, 0.0
        %v1062 = vrot.slane %v1061, 4
        %v1063 = vadd.f32 %v1061, %v1062
        %v1064 = vrot.slane %v1063, 2
        %v1065 = vadd.f32 %v1063, %v1064
        %v1066 = vrot.slane %v1065, 1
        %v1067 = vadd.f32 %v1065, %v1066
        %1068 = vadd.xlane.f32.xlu0 %v1067
        %v1069 = vpop.xlane.xlu0 %1068
        %vm1070 = vcmp.ge.f32.partialorder %v1069, %v864
        %v1071 = vsel %vm1070, %v1053, %v1052
        %v1072 = vadd.s32 %v1071, 524288
        %v1073 = vlaneseq
        %v1074 = vshrl.u32 %v1073, 7
        %v1075 = vsub.s32 4, %v1074
        %v1076 = vrot.slane %v1072, %v1075
        %vm1077 = vcmp.ge.s32.totalorder %v865, %v1076
        %v1078 = vsel %vm1077, 1, 0
        %v1079 = vcvt.s32.f32 %v1078
        %v1080 = vsel %vm870, %v1079, 0.0
        %v1081 = vrot.slane %v1080, 4
        %v1082 = vadd.f32 %v1080, %v1081
        %v1083 = vrot.slane %v1082, 2
        %v1084 = vadd.f32 %v1082, %v1083
        %v1085 = vrot.slane %v1084, 1
        %v1086 = vadd.f32 %v1084, %v1085
        %1087 = vadd.xlane.f32.xlu0 %v1086
        %v1088 = vpop.xlane.xlu0 %1087
        %vm1089 = vcmp.ge.f32.partialorder %v1088, %v864
        %v1090 = vsel %vm1089, %v1072, %v1071
        %v1091 = vadd.s32 %v1090, 262144
        %v1092 = vlaneseq
        %v1093 = vshrl.u32 %v1092, 7
        %v1094 = vsub.s32 4, %v1093
        %v1095 = vrot.slane %v1091, %v1094
        %vm1096 = vcmp.ge.s32.totalorder %v865, %v1095
        %v1097 = vsel %vm1096, 1, 0
        %v1098 = vcvt.s32.f32 %v1097
        %v1099 = vsel %vm870, %v1098, 0.0
        %v1100 = vrot.slane %v1099, 4
        %v1101 = vadd.f32 %v1099, %v1100
        %v1102 = vrot.slane %v1101, 2
        %v1103 = vadd.f32 %v1101, %v1102
        %v1104 = vrot.slane %v1103, 1
        %v1105 = vadd.f32 %v1103, %v1104
        %1106 = vadd.xlane.f32.xlu0 %v1105
        %v1107 = vpop.xlane.xlu0 %1106
        %vm1108 = vcmp.ge.f32.partialorder %v1107, %v864
        %v1109 = vsel %vm1108, %v1091, %v1090
        %v1110 = vadd.s32 %v1109, 131072
        %v1111 = vlaneseq
        %v1112 = vshrl.u32 %v1111, 7
        %v1113 = vsub.s32 4, %v1112
        %v1114 = vrot.slane %v1110, %v1113
        %vm1115 = vcmp.ge.s32.totalorder %v865, %v1114
        %v1116 = vsel %vm1115, 1, 0
        %v1117 = vcvt.s32.f32 %v1116
        %v1118 = vsel %vm870, %v1117, 0.0
        %v1119 = vrot.slane %v1118, 4
        %v1120 = vadd.f32 %v1118, %v1119
        %v1121 = vrot.slane %v1120, 2
        %v1122 = vadd.f32 %v1120, %v1121
        %v1123 = vrot.slane %v1122, 1
        %v1124 = vadd.f32 %v1122, %v1123
        %1125 = vadd.xlane.f32.xlu0 %v1124
        %v1126 = vpop.xlane.xlu0 %1125
        %vm1127 = vcmp.ge.f32.partialorder %v1126, %v864
        %v1128 = vsel %vm1127, %v1110, %v1109
        %v1129 = vadd.s32 %v1128, 65536
        %v1130 = vlaneseq
        %v1131 = vshrl.u32 %v1130, 7
        %v1132 = vsub.s32 4, %v1131
        %v1133 = vrot.slane %v1129, %v1132
        %vm1134 = vcmp.ge.s32.totalorder %v865, %v1133
        %v1135 = vsel %vm1134, 1, 0
        %v1136 = vcvt.s32.f32 %v1135
        %v1137 = vsel %vm870, %v1136, 0.0
        %v1138 = vrot.slane %v1137, 4
        %v1139 = vadd.f32 %v1137, %v1138
        %v1140 = vrot.slane %v1139, 2
        %v1141 = vadd.f32 %v1139, %v1140
        %v1142 = vrot.slane %v1141, 1
        %v1143 = vadd.f32 %v1141, %v1142
        %1144 = vadd.xlane.f32.xlu0 %v1143
        %v1145 = vpop.xlane.xlu0 %1144
        %vm1146 = vcmp.ge.f32.partialorder %v1145, %v864
        %v1147 = vsel %vm1146, %v1129, %v1128
        %v1148 = vadd.s32 %v1147, 32768
        %v1149 = vlaneseq
        %v1150 = vshrl.u32 %v1149, 7
        %v1151 = vsub.s32 4, %v1150
        %v1152 = vrot.slane %v1148, %v1151
        %vm1153 = vcmp.ge.s32.totalorder %v865, %v1152
        %v1154 = vsel %vm1153, 1, 0
        %v1155 = vcvt.s32.f32 %v1154
        %v1156 = vsel %vm870, %v1155, 0.0
        %v1157 = vrot.slane %v1156, 4
        %v1158 = vadd.f32 %v1156, %v1157
        %v1159 = vrot.slane %v1158, 2
        %v1160 = vadd.f32 %v1158, %v1159
        %v1161 = vrot.slane %v1160, 1
        %v1162 = vadd.f32 %v1160, %v1161
        %1163 = vadd.xlane.f32.xlu0 %v1162
        %v1164 = vpop.xlane.xlu0 %1163
        %vm1165 = vcmp.ge.f32.partialorder %v1164, %v864
        %v1166 = vsel %vm1165, %v1148, %v1147
        %v1167 = vadd.s32 %v1166, 16384
        %v1168 = vlaneseq
        %v1169 = vshrl.u32 %v1168, 7
        %v1170 = vsub.s32 4, %v1169
        %v1171 = vrot.slane %v1167, %v1170
        %vm1172 = vcmp.ge.s32.totalorder %v865, %v1171
        %v1173 = vsel %vm1172, 1, 0
        %v1174 = vcvt.s32.f32 %v1173
        %v1175 = vsel %vm870, %v1174, 0.0
        %v1176 = vrot.slane %v1175, 4
        %v1177 = vadd.f32 %v1175, %v1176
        %v1178 = vrot.slane %v1177, 2
        %v1179 = vadd.f32 %v1177, %v1178
        %v1180 = vrot.slane %v1179, 1
        %v1181 = vadd.f32 %v1179, %v1180
        %1182 = vadd.xlane.f32.xlu0 %v1181
        %v1183 = vpop.xlane.xlu0 %1182
        %vm1184 = vcmp.ge.f32.partialorder %v1183, %v864
        %v1185 = vsel %vm1184, %v1167, %v1166
        %v1186 = vadd.s32 %v1185, 8192
        %v1187 = vlaneseq
        %v1188 = vshrl.u32 %v1187, 7
        %v1189 = vsub.s32 4, %v1188
        %v1190 = vrot.slane %v1186, %v1189
        %vm1191 = vcmp.ge.s32.totalorder %v865, %v1190
        %v1192 = vsel %vm1191, 1, 0
        %v1193 = vcvt.s32.f32 %v1192
        %v1194 = vsel %vm870, %v1193, 0.0
        %v1195 = vrot.slane %v1194, 4
        %v1196 = vadd.f32 %v1194, %v1195
        %v1197 = vrot.slane %v1196, 2
        %v1198 = vadd.f32 %v1196, %v1197
        %v1199 = vrot.slane %v1198, 1
        %v1200 = vadd.f32 %v1198, %v1199
        %1201 = vadd.xlane.f32.xlu0 %v1200
        %v1202 = vpop.xlane.xlu0 %1201
        %vm1203 = vcmp.ge.f32.partialorder %v1202, %v864
        %v1204 = vsel %vm1203, %v1186, %v1185
        %v1205 = vadd.s32 %v1204, 4096
        %v1206 = vlaneseq
        %v1207 = vshrl.u32 %v1206, 7
        %v1208 = vsub.s32 4, %v1207
        %v1209 = vrot.slane %v1205, %v1208
        %vm1210 = vcmp.ge.s32.totalorder %v865, %v1209
        %v1211 = vsel %vm1210, 1, 0
        %v1212 = vcvt.s32.f32 %v1211
        %v1213 = vsel %vm870, %v1212, 0.0
        %v1214 = vrot.slane %v1213, 4
        %v1215 = vadd.f32 %v1213, %v1214
        %v1216 = vrot.slane %v1215, 2
        %v1217 = vadd.f32 %v1215, %v1216
        %v1218 = vrot.slane %v1217, 1
        %v1219 = vadd.f32 %v1217, %v1218
        %1220 = vadd.xlane.f32.xlu0 %v1219
        %v1221 = vpop.xlane.xlu0 %1220
        %vm1222 = vcmp.ge.f32.partialorder %v1221, %v864
        %v1223 = vsel %vm1222, %v1205, %v1204
        %v1224 = vadd.s32 %v1223, 2048
        %v1225 = vlaneseq
        %v1226 = vshrl.u32 %v1225, 7
        %v1227 = vsub.s32 4, %v1226
        %v1228 = vrot.slane %v1224, %v1227
        %vm1229 = vcmp.ge.s32.totalorder %v865, %v1228
        %v1230 = vsel %vm1229, 1, 0
        %v1231 = vcvt.s32.f32 %v1230
        %v1232 = vsel %vm870, %v1231, 0.0
        %v1233 = vrot.slane %v1232, 4
        %v1234 = vadd.f32 %v1232, %v1233
        %v1235 = vrot.slane %v1234, 2
        %v1236 = vadd.f32 %v1234, %v1235
        %v1237 = vrot.slane %v1236, 1
        %v1238 = vadd.f32 %v1236, %v1237
        %1239 = vadd.xlane.f32.xlu0 %v1238
        %v1240 = vpop.xlane.xlu0 %1239
        %vm1241 = vcmp.ge.f32.partialorder %v1240, %v864
        %v1242 = vsel %vm1241, %v1224, %v1223
        %v1243 = vadd.s32 %v1242, 1024
        %v1244 = vlaneseq
        %v1245 = vshrl.u32 %v1244, 7
        %v1246 = vsub.s32 4, %v1245
        %v1247 = vrot.slane %v1243, %v1246
        %vm1248 = vcmp.ge.s32.totalorder %v865, %v1247
        %v1249 = vsel %vm1248, 1, 0
        %v1250 = vcvt.s32.f32 %v1249
        %v1251 = vsel %vm870, %v1250, 0.0
        %v1252 = vrot.slane %v1251, 4
        %v1253 = vadd.f32 %v1251, %v1252
        %v1254 = vrot.slane %v1253, 2
        %v1255 = vadd.f32 %v1253, %v1254
        %v1256 = vrot.slane %v1255, 1
        %v1257 = vadd.f32 %v1255, %v1256
        %1258 = vadd.xlane.f32.xlu0 %v1257
        %v1259 = vpop.xlane.xlu0 %1258
        %vm1260 = vcmp.ge.f32.partialorder %v1259, %v864
        %v1261 = vsel %vm1260, %v1243, %v1242
        %v1262 = vadd.s32 %v1261, 512
        %v1263 = vlaneseq
        %v1264 = vshrl.u32 %v1263, 7
        %v1265 = vsub.s32 4, %v1264
        %v1266 = vrot.slane %v1262, %v1265
        %vm1267 = vcmp.ge.s32.totalorder %v865, %v1266
        %v1268 = vsel %vm1267, 1, 0
        %v1269 = vcvt.s32.f32 %v1268
        %v1270 = vsel %vm870, %v1269, 0.0
        %v1271 = vrot.slane %v1270, 4
        %v1272 = vadd.f32 %v1270, %v1271
        %v1273 = vrot.slane %v1272, 2
        %v1274 = vadd.f32 %v1272, %v1273
        %v1275 = vrot.slane %v1274, 1
        %v1276 = vadd.f32 %v1274, %v1275
        %1277 = vadd.xlane.f32.xlu0 %v1276
        %v1278 = vpop.xlane.xlu0 %1277
        %vm1279 = vcmp.ge.f32.partialorder %v1278, %v864
        %v1280 = vsel %vm1279, %v1262, %v1261
        %v1281 = vadd.s32 %v1280, 256
        %v1282 = vlaneseq
        %v1283 = vshrl.u32 %v1282, 7
        %v1284 = vsub.s32 4, %v1283
        %v1285 = vrot.slane %v1281, %v1284
        %vm1286 = vcmp.ge.s32.totalorder %v865, %v1285
        %v1287 = vsel %vm1286, 1, 0
        %v1288 = vcvt.s32.f32 %v1287
        %v1289 = vsel %vm870, %v1288, 0.0
        %v1290 = vrot.slane %v1289, 4
        %v1291 = vadd.f32 %v1289, %v1290
        %v1292 = vrot.slane %v1291, 2
        %v1293 = vadd.f32 %v1291, %v1292
        %v1294 = vrot.slane %v1293, 1
        %v1295 = vadd.f32 %v1293, %v1294
        %1296 = vadd.xlane.f32.xlu0 %v1295
        %v1297 = vpop.xlane.xlu0 %1296
        %vm1298 = vcmp.ge.f32.partialorder %v1297, %v864
        %v1299 = vsel %vm1298, %v1281, %v1280
        %v1300 = vadd.s32 %v1299, 128
        %v1301 = vlaneseq
        %v1302 = vshrl.u32 %v1301, 7
        %v1303 = vsub.s32 4, %v1302
        %v1304 = vrot.slane %v1300, %v1303
        %vm1305 = vcmp.ge.s32.totalorder %v865, %v1304
        %v1306 = vsel %vm1305, 1, 0
        %v1307 = vcvt.s32.f32 %v1306
        %v1308 = vsel %vm870, %v1307, 0.0
        %v1309 = vrot.slane %v1308, 4
        %v1310 = vadd.f32 %v1308, %v1309
        %v1311 = vrot.slane %v1310, 2
        %v1312 = vadd.f32 %v1310, %v1311
        %v1313 = vrot.slane %v1312, 1
        %v1314 = vadd.f32 %v1312, %v1313
        %1315 = vadd.xlane.f32.xlu0 %v1314
        %v1316 = vpop.xlane.xlu0 %1315
        %vm1317 = vcmp.ge.f32.partialorder %v1316, %v864
        %v1318 = vsel %vm1317, %v1300, %v1299
        %v1319 = vadd.s32 %v1318, 64
        %v1320 = vlaneseq
        %v1321 = vshrl.u32 %v1320, 7
        %v1322 = vsub.s32 4, %v1321
        %v1323 = vrot.slane %v1319, %v1322
        %vm1324 = vcmp.ge.s32.totalorder %v865, %v1323
        %v1325 = vsel %vm1324, 1, 0
        %v1326 = vcvt.s32.f32 %v1325
        %v1327 = vsel %vm870, %v1326, 0.0
        %v1328 = vrot.slane %v1327, 4
        %v1329 = vadd.f32 %v1327, %v1328
        %v1330 = vrot.slane %v1329, 2
        %v1331 = vadd.f32 %v1329, %v1330
        %v1332 = vrot.slane %v1331, 1
        %v1333 = vadd.f32 %v1331, %v1332
        %1334 = vadd.xlane.f32.xlu0 %v1333
        %v1335 = vpop.xlane.xlu0 %1334
        %vm1336 = vcmp.ge.f32.partialorder %v1335, %v864
        %v1337 = vsel %vm1336, %v1319, %v1318
        %v1338 = vadd.s32 %v1337, 32
        %v1339 = vlaneseq
        %v1340 = vshrl.u32 %v1339, 7
        %v1341 = vsub.s32 4, %v1340
        %v1342 = vrot.slane %v1338, %v1341
        %vm1343 = vcmp.ge.s32.totalorder %v865, %v1342
        %v1344 = vsel %vm1343, 1, 0
        %v1345 = vcvt.s32.f32 %v1344
        %v1346 = vsel %vm870, %v1345, 0.0
        %v1347 = vrot.slane %v1346, 4
        %v1348 = vadd.f32 %v1346, %v1347
        %v1349 = vrot.slane %v1348, 2
        %v1350 = vadd.f32 %v1348, %v1349
        %v1351 = vrot.slane %v1350, 1
        %v1352 = vadd.f32 %v1350, %v1351
        %1353 = vadd.xlane.f32.xlu0 %v1352
        %v1354 = vpop.xlane.xlu0 %1353
        %vm1355 = vcmp.ge.f32.partialorder %v1354, %v864
        %v1356 = vsel %vm1355, %v1338, %v1337
        %v1357 = vadd.s32 %v1356, 16
        %v1358 = vlaneseq
        %v1359 = vshrl.u32 %v1358, 7
        %v1360 = vsub.s32 4, %v1359
        %v1361 = vrot.slane %v1357, %v1360
        %vm1362 = vcmp.ge.s32.totalorder %v865, %v1361
        %v1363 = vsel %vm1362, 1, 0
        %v1364 = vcvt.s32.f32 %v1363
        %v1365 = vsel %vm870, %v1364, 0.0
        %v1366 = vrot.slane %v1365, 4
        %v1367 = vadd.f32 %v1365, %v1366
        %v1368 = vrot.slane %v1367, 2
        %v1369 = vadd.f32 %v1367, %v1368
        %v1370 = vrot.slane %v1369, 1
        %v1371 = vadd.f32 %v1369, %v1370
        %1372 = vadd.xlane.f32.xlu0 %v1371
        %v1373 = vpop.xlane.xlu0 %1372
        %vm1374 = vcmp.ge.f32.partialorder %v1373, %v864
        %v1375 = vsel %vm1374, %v1357, %v1356
        %v1376 = vadd.s32 %v1375, 8
        %v1377 = vlaneseq
        %v1378 = vshrl.u32 %v1377, 7
        %v1379 = vsub.s32 4, %v1378
        %v1380 = vrot.slane %v1376, %v1379
        %vm1381 = vcmp.ge.s32.totalorder %v865, %v1380
        %v1382 = vsel %vm1381, 1, 0
        %v1383 = vcvt.s32.f32 %v1382
        %v1384 = vsel %vm870, %v1383, 0.0
        %v1385 = vrot.slane %v1384, 4
        %v1386 = vadd.f32 %v1384, %v1385
        %v1387 = vrot.slane %v1386, 2
        %v1388 = vadd.f32 %v1386, %v1387
        %v1389 = vrot.slane %v1388, 1
        %v1390 = vadd.f32 %v1388, %v1389
        %1391 = vadd.xlane.f32.xlu0 %v1390
        %v1392 = vpop.xlane.xlu0 %1391
        %vm1393 = vcmp.ge.f32.partialorder %v1392, %v864
        %v1394 = vsel %vm1393, %v1376, %v1375
        %v1395 = vadd.s32 %v1394, 4
        %v1396 = vlaneseq
        %v1397 = vshrl.u32 %v1396, 7
        %v1398 = vsub.s32 4, %v1397
        %v1399 = vrot.slane %v1395, %v1398
        %vm1400 = vcmp.ge.s32.totalorder %v865, %v1399
        %v1401 = vsel %vm1400, 1, 0
        %v1402 = vcvt.s32.f32 %v1401
        %v1403 = vsel %vm870, %v1402, 0.0
        %v1404 = vrot.slane %v1403, 4
        %v1405 = vadd.f32 %v1403, %v1404
        %v1406 = vrot.slane %v1405, 2
        %v1407 = vadd.f32 %v1405, %v1406
        %v1408 = vrot.slane %v1407, 1
        %v1409 = vadd.f32 %v1407, %v1408
        %1410 = vadd.xlane.f32.xlu0 %v1409
        %v1411 = vpop.xlane.xlu0 %1410
        %vm1412 = vcmp.ge.f32.partialorder %v1411, %v864
        %v1413 = vsel %vm1412, %v1395, %v1394
        %v1414 = vadd.s32 %v1413, 2
        %v1415 = vlaneseq
        %v1416 = vshrl.u32 %v1415, 7
        %v1417 = vsub.s32 4, %v1416
        %v1418 = vrot.slane %v1414, %v1417
        %vm1419 = vcmp.ge.s32.totalorder %v865, %v1418
        %v1420 = vsel %vm1419, 1, 0
        %v1421 = vcvt.s32.f32 %v1420
        %v1422 = vsel %vm870, %v1421, 0.0
        %v1423 = vrot.slane %v1422, 4
        %v1424 = vadd.f32 %v1422, %v1423
        %v1425 = vrot.slane %v1424, 2
        %v1426 = vadd.f32 %v1424, %v1425
        %v1427 = vrot.slane %v1426, 1
        %v1428 = vadd.f32 %v1426, %v1427
        %1429 = vadd.xlane.f32.xlu0 %v1428
        %v1430 = vpop.xlane.xlu0 %1429
        %vm1431 = vcmp.ge.f32.partialorder %v1430, %v864
        %v1432 = vsel %vm1431, %v1414, %v1413
        %v1433 = vadd.s32 %v1432, 1
        %v1434 = vlaneseq
        %v1435 = vshrl.u32 %v1434, 7
        %v1436 = vsub.s32 4, %v1435
        %v1437 = vrot.slane %v1433, %v1436
        %vm1438 = vcmp.ge.s32.totalorder %v865, %v1437
        %v1439 = vsel %vm1438, 1, 0
        %v1440 = vcvt.s32.f32 %v1439
        %v1441 = vsel %vm870, %v1440, 0.0
        %v1442 = vrot.slane %v1441, 4
        %v1443 = vadd.f32 %v1441, %v1442
        %v1444 = vrot.slane %v1443, 2
        %v1445 = vadd.f32 %v1443, %v1444
        %v1446 = vrot.slane %v1445, 1
        %v1447 = vadd.f32 %v1445, %v1446
        %1448 = vadd.xlane.f32.xlu0 %v1447
        %v1449 = vpop.xlane.xlu0 %1448
        %vm1450 = vcmp.ge.f32.partialorder %v1449, %v864
        %v1451 = vsel %vm1450, %v1433, %v1432
        %v1453 = vlaneseq
        %v1454 = vshrl.u32 %v1453, 7
        %v1455 = vsub.s32 4, %v1454
        %v1456 = vrot.slane %v1451, %v1455
        %vm1457 = vcmp.gt.f32.partialorder %v865, %v1456
        %v1458 = vsel %vm1457, %v865, 0.0
        %v1459 = vsel %vm870, %v1458, 0.0
        %v1460 = vrot.slane %v1459, 4
        %v1461 = vadd.f32 %v1459, %v1460
        %v1462 = vrot.slane %v1461, 2
        %v1463 = vadd.f32 %v1461, %v1462
        %v1464 = vrot.slane %v1463, 1
        %v1465 = vadd.f32 %v1463, %v1464
        %1466 = vadd.xlane.f32.xlu0 %v1465
        %v1467 = vpop.xlane.xlu0 %1466
        %v1468 = vsel %vm1457, 1, 0
        %v1469 = vcvt.s32.f32 %v1468
        %v1470 = vsel %vm870, %v1469, 0.0
        %v1471 = vrot.slane %v1470, 4
        %v1472 = vadd.f32 %v1470, %v1471
        %v1473 = vrot.slane %v1472, 2
        %v1474 = vadd.f32 %v1472, %v1473
        %v1475 = vrot.slane %v1474, 1
        %v1476 = vadd.f32 %v1474, %v1475
        %1477 = vadd.xlane.f32.xlu0 %v1476
        %v1478 = vpop.xlane.xlu0 %1477
        %vm1479 = vcmp.lt.f32.partialorder %v1478, %v864
        %v1480 = vsub.f32 %v864, %v1478
        %v1481 = vmul.f32 %v1480, %v1451
        %v1482 = vsel %vm1479, %v1481, 0.0
        %vm1483 = vcmp.gt.f32.partialorder %v864, 0.0
        %v1484 = vadd.f32 %v1467, %v1482
        %v1485 = vsel %vm1483, %v1484, 0.0
        %vm1486 = vcmp.eq.s32.totalorder %v426, 0
        %v1487 = vsel %vm1486, %v849, 0.0
        %vm1488 = vcmp.eq.s32.totalorder %v426, 1
        %v1489 = vsel %vm1488, %v856, 0.0
        %v1490 = vadd.f32 %v1487, %v1489
        %vm1491 = vcmp.eq.s32.totalorder %v426, 2
        %v1492 = vsel %vm1491, %v1485, 0.0
        %v1493 = vadd.f32 %v1490, %v1492
        %vm1494 = vcmp.eq.s32.totalorder %v426, 3
        %v1495 = vsel %vm1494, %v780, 0.0
        %v1496 = vadd.f32 %v1493, %v1495
        %1497 = vst [vmem:[%s272 - $0x4] sm:$0x10] %v1496
        %s1498 = sand.u32 %s153, 1
        %s1499 = scalar_lea.sflag [#allocation5], %s1498
        %s1500 = sand.u32 %s153, 1
        %s1501 = scalar_lea.vmem [#allocation6], %s1500
        // Predicated region
        $region45: #{tpu_custom_call.1} parent=39 // pred_check
          %p1502 = pneg %p163
        $region46: #{tpu_custom_call.1} parent=39 // pred_check_branch
          %1504 = sbr.rel (%p1502) target = $region48
        $region47: #{tpu_custom_call.1} parent=39 // pred_region
          %s1506 = ssub.s32 16, 16
          %1507 = vsyncadd %s1499, %s1506
          %s1508 = smul.addr %s20, 16
          %s1509 = scalar_lea.hbm %s5, %s1508
          %s1511 = sshll.u32 %s1501, 4
          %s1512 = int_to_ptr.vmem [resolvable:$true] %s1511
          %1514 = dma.vmem_to_hbm [thread:$0]  %s1512, 16, %s1509, %s1499
        $region48: #{tpu_custom_call.1} parent=39 // pred_fallthru
          _
      $region40: #{tpu_custom_call.1} parent=5 // pred_fallthru
        _
      %p1515 = scmp.le.s32.totalorder 2, %s15
      // Predicated region
      $region49: #{tpu_custom_call.1} parent=5 // pred_check
        %p1516 = pneg %p1515
      $region50: #{tpu_custom_call.1} parent=5 // pred_check_branch
        %1518 = sbr.rel (%p1516) target = $region52
      $region51: #{tpu_custom_call.1} parent=5 // pred_region
        %s1519 = ssub.s32 %s15, 2
        // Predicated region
        $region53: #{tpu_custom_call.1} parent=51 // pred_check
          %p1520 = pneg %p169
        $region54: #{tpu_custom_call.1} parent=51 // pred_check_branch
          %1522 = sbr.rel (%p1520) target = $region56
        $region55: #{tpu_custom_call.1} parent=51 // pred_region
          %s1523 = sand.u32 %s154, 1
          %s1524 = scalar_lea.sflag [#allocation5], %s1523
          %s1525 = sand.u32 %s154, 1
          %s1526 = scalar_lea.vmem [#allocation6], %s1525
          %1527 = dma.done %s1524, 16
        $region56: #{tpu_custom_call.1} parent=51 // pred_fallthru
          _
      $region52: #{tpu_custom_call.1} parent=5 // pred_fallthru
        _
    $region6: #{tpu_custom_call.1} parent=1 // loop_footer
      %s19 = sadd.s32 1, %s15
    $region7: #{tpu_custom_call.1} parent=1 // loop_footer_branch
      %14 = sbr.rel target = $region3
    $region8: #{tpu_custom_call.1} parent=1 // loop_exit
      _
    %1528 = vsyncpa [#allocation4], 1
    %s1529 = scalar_lea.sflag [#allocation4], 1
    %1530 = vsyncpa %s1529, 1
    %1531 = vsyncpa [#allocation5], 1
    %s1532 = scalar_lea.sflag [#allocation5], 1
    %1533 = vsyncpa %s1532, 1

</llo_original>
